<compile_context>
chip_gen: v5e
topology: v5e:2x2
jax: 0.10.0
libtpu: 0.0.40
codegen_flags: <defaults>
</compile_context>

<pallas_src>
import jax
import jax.numpy as jnp
from jax import lax
from jax.experimental import pallas as pl
from jax.experimental.pallas import tpu as pltpu
import numpy as np

HIDDEN = 16
OUT = 5


def gru_fc_kernel(x_ref, wih_ref, whh_ref, brz_ref, bin_ref, bhn_ref,
                  wfc_ref, bfc_ref, out_ref):
    T = x_ref.shape[0]
    TB = x_ref.shape[2]
    H = HIDDEN

    # Loop-invariant loads / slices (8-aligned sublane slices at 0:32 and 32:48).
    wih_rz = wih_ref[0:2 * H, :]        # (2H, 1)
    wih_n = wih_ref[2 * H:3 * H, :]     # (H, 1)
    whh_rz = whh_ref[0:2 * H, :]        # (2H, H)
    whh_n = whh_ref[2 * H:3 * H, :]     # (H, H)

    # Biases pre-broadcast to lane width ONCE (JAX does not CSE broadcast_in_dim
    # across loop iterations, so doing this per step would sit on the chain).
    brz_b = jnp.broadcast_to(brz_ref[...], (2 * H, TB))   # b_ih[0:2H] + b_hh[0:2H]
    bin_b = jnp.broadcast_to(bin_ref[...], (H, TB))       # b_ih[2H:3H]
    bhn_b = jnp.broadcast_to(bhn_ref[...], (H, TB))       # b_hh[2H:3H] (must stay in r*(..))

    def step(t, h):
        x_t = x_ref[t]                                                    # (1, TB)

        # Two MXU pushes: r/z block and n block. The sigmoid only depends on gh_rz,
        # so it overlaps with the gh_n drain.
        gh_rz = jnp.dot(whh_rz, h, preferred_element_type=jnp.float32)   # (2H, TB)
        gh_n = jnp.dot(whh_n, h, preferred_element_type=jnp.float32)     # (H, TB)

        # Input-gate terms are h-independent -> off-chain VALU filler.
        gi_rz = x_t * wih_rz + brz_b                                      # (2H, TB)
        gi_n = x_t * wih_n + bin_b                                        # (H, TB)

        # Fused r/z sigmoid: one EUP pass over the first 2H gate rows.
        s = jax.nn.sigmoid(gi_rz + gh_rz)
        r = s[0:H, :]
        z = s[H:2 * H, :]
        n = jnp.tanh(gi_n + r * (gh_n + bhn_b))
        return (1.0 - z) * n + z * h                                      # (H, TB)

    h0 = jnp.zeros((H, TB), dtype=jnp.float32)
    h_last = lax.fori_loop(0, T, step, h0, unroll=min(T, 8))

    # GRU output at the last timestep == final hidden state.
    feat = jnp.maximum(h_last, 0.0)   # ReLU; Dropout(p=0.3) is identity in eval mode.
    out_ref[...] = jnp.dot(wfc_ref[...], feat,
                           preferred_element_type=jnp.float32) + bfc_ref[...]


def my_rnn_forward(x, params):
    """x: (B, T, 1) float32, batch_first like the PyTorch module. Returns (B, 5)."""
    B, T, _ = x.shape
    H = HIDDEN

    # Put batch on the lane axis: (B, T, 1) -> (T, 1, B).
    # (Negligible at input_size=1; could be fused into the input DMA if it ever matters.)
    x_t1b = jnp.transpose(x.astype(jnp.float32), (1, 2, 0))

    w_ih = params["w_ih"].astype(jnp.float32)                     # (3H, 1)
    w_hh = params["w_hh"].astype(jnp.float32)                     # (3H, H)
    b_ih = params["b_ih"].astype(jnp.float32)                     # (3H,)
    b_hh = params["b_hh"].astype(jnp.float32)                     # (3H,)
    w_fc = params["w_fc"].astype(jnp.float32)                     # (OUT, H)
    b_fc = params["b_fc"].astype(jnp.float32).reshape(OUT, 1)

    # Fold the r/z half of b_hh into the input bias (off the recurrent chain).
    # The n-gate b_hh must stay inside r*(W_hn h + b_hn) -> passed separately.
    brz = (b_ih[0:2 * H] + b_hh[0:2 * H]).reshape(2 * H, 1)
    bin_ = b_ih[2 * H:3 * H].reshape(H, 1)
    bhn = b_hh[2 * H:3 * H].reshape(H, 1)

    # Batch-tile grid; keep TB=128 for B>128 (megacore on v7x); never shrink below 128.
    TB = B if B <= 128 else 128
    grid = (pl.cdiv(B, TB),)

    vmem = pl.BlockSpec(memory_space=pltpu.MemorySpace.VMEM)
    cost = pl.CostEstimate(
        flops=int(T * B * (2 * 3 * H * H + 10 * 3 * H) + B * 2 * OUT * H),
        transcendentals=int(T * B * 3 * H),
        bytes_accessed=int(4 * (T * B + 3 * H * (H + 3) + OUT * (H + 1) + OUT * B)),
    )

    out_cb = pl.pallas_call(
        gru_fc_kernel,
        out_shape=jax.ShapeDtypeStruct((OUT, B), jnp.float32),
        grid=grid,
        in_specs=[
            pl.BlockSpec((T, 1, TB), lambda b: (0, 0, b)),   # x, tiled over batch lanes
            vmem, vmem, vmem, vmem, vmem, vmem, vmem,        # weights/biases, whole
        ],
        out_specs=pl.BlockSpec((OUT, TB), lambda b: (0, b)),
        compiler_params=pltpu.CompilerParams(
            dimension_semantics=("parallel",)),
        cost_estimate=cost,
    )(x_t1b, w_ih, w_hh, brz, bin_, bhn, w_fc, b_fc)

    return out_cb.T                                               # (B, OUT)


def my_rnn_reference(x, params):
    """Pure-JAX reference with PyTorch GRU eval semantics, for validation."""
    B, T, _ = x.shape
    H = HIDDEN
    w_ih, w_hh = params["w_ih"], params["w_hh"]
    b_ih, b_hh = params["b_ih"], params["b_hh"]
    h = jnp.zeros((B, H), jnp.float32)
    for t in range(T):
        x_t = x[:, t, :]                                      # (B, 1)
        gi = x_t @ w_ih.T + b_ih
        gh = h @ w_hh.T + b_hh
        r = jax.nn.sigmoid(gi[:, :H] + gh[:, :H])
        z = jax.nn.sigmoid(gi[:, H:2 * H] + gh[:, H:2 * H])
        n = jnp.tanh(gi[:, 2 * H:] + r * gh[:, 2 * H:])
        h = (1.0 - z) * n + z * h
    feat = jax.nn.relu(h)
    return feat @ params["w_fc"].T + params["b_fc"]


def init_params(key):
    """Deterministic init mirroring PyTorch default uniform ranges."""
    H = HIDDEN
    k_gru = 1.0 / np.sqrt(H)
    k_fc = 1.0 / np.sqrt(H)
    ks = jax.random.split(key, 6)
    return {
        "w_ih": jax.random.uniform(ks[0], (3 * H, 1), jnp.float32, -k_gru, k_gru),
        "w_hh": jax.random.uniform(ks[1], (3 * H, H), jnp.float32, -k_gru, k_gru),
        "b_ih": jax.random.uniform(ks[2], (3 * H,), jnp.float32, -k_gru, k_gru),
        "b_hh": jax.random.uniform(ks[3], (3 * H,), jnp.float32, -k_gru, k_gru),
        "w_fc": jax.random.uniform(ks[4], (OUT, H), jnp.float32, -k_fc, k_fc),
        "b_fc": jax.random.uniform(ks[5], (OUT,), jnp.float32, -k_fc, k_fc),
    }


if __name__ == "__main__":
    key = jax.random.PRNGKey(0)
    k_x, k_p = jax.random.split(key)

    B, T = 2, 8
    x = jax.random.normal(k_x, (B, T, 1), jnp.float32)        # batch_first, input_size=1
    params = init_params(k_p)

    out = my_rnn_forward(x, params)
    out = jax.block_until_ready(out)

    ref = my_rnn_reference(x, params)
    assert out.shape == (B, OUT)
    np.testing.assert_allclose(np.asarray(out), np.asarray(ref), atol=1e-5, rtol=1e-5)

    print("KERNEL_OK")
</pallas_src>

<mosaic_0001>
module attributes {stable_mosaic.version = 11 : i64} {
  func.func @gru_fc_kernel(%arg0: i32, %arg1: memref<8x1x2xf32, #tpu.memory_space<vmem>>, %arg2: memref<48x1xf32, #tpu.memory_space<vmem>>, %arg3: memref<48x16xf32, #tpu.memory_space<vmem>>, %arg4: memref<32x1xf32, #tpu.memory_space<vmem>>, %arg5: memref<16x1xf32, #tpu.memory_space<vmem>>, %arg6: memref<16x1xf32, #tpu.memory_space<vmem>>, %arg7: memref<5x16xf32, #tpu.memory_space<vmem>>, %arg8: memref<5x1xf32, #tpu.memory_space<vmem>>, %arg9: memref<5x2xf32, #tpu.memory_space<vmem>>) attributes {dimension_semantics = [#tpu.dimension_semantics<parallel>], iteration_bounds = array<i64: 1>, scalar_prefetch = 0 : i64, scratch_operands = 0 : i64, tpu.core_type = #tpu.core_type<tc>, window_params = [{transform_indices = @transform_0, window_bounds = array<i64: 8, 1, 2>}, {pipeline_mode = #tpu.pipeline_mode<synchronous>, transform_indices = @transform_1, window_bounds = array<i64: 48, 1>}, {pipeline_mode = #tpu.pipeline_mode<synchronous>, transform_indices = @transform_2, window_bounds = array<i64: 48, 16>}, {pipeline_mode = #tpu.pipeline_mode<synchronous>, transform_indices = @transform_3, window_bounds = array<i64: 32, 1>}, {pipeline_mode = #tpu.pipeline_mode<synchronous>, transform_indices = @transform_4, window_bounds = array<i64: 16, 1>}, {pipeline_mode = #tpu.pipeline_mode<synchronous>, transform_indices = @transform_5, window_bounds = array<i64: 16, 1>}, {pipeline_mode = #tpu.pipeline_mode<synchronous>, transform_indices = @transform_6, window_bounds = array<i64: 5, 16>}, {pipeline_mode = #tpu.pipeline_mode<synchronous>, transform_indices = @transform_7, window_bounds = array<i64: 5, 1>}, {transform_indices = @transform_8, window_bounds = array<i64: 5, 2>}]} {
    %c0 = arith.constant 0 : index
    %c0_0 = arith.constant 0 : index
    %0 = vector.load %arg2[%c0, %c0_0] : memref<48x1xf32, #tpu.memory_space<vmem>>, vector<32x1xf32>
    %c32 = arith.constant 32 : index
    %c0_1 = arith.constant 0 : index
    %1 = vector.load %arg2[%c32, %c0_1] : memref<48x1xf32, #tpu.memory_space<vmem>>, vector<16x1xf32>
    %c0_2 = arith.constant 0 : index
    %c0_3 = arith.constant 0 : index
    %2 = vector.load %arg3[%c0_2, %c0_3] : memref<48x16xf32, #tpu.memory_space<vmem>>, vector<32x16xf32>
    %c32_4 = arith.constant 32 : index
    %c0_5 = arith.constant 0 : index
    %3 = vector.load %arg3[%c32_4, %c0_5] : memref<48x16xf32, #tpu.memory_space<vmem>>, vector<16x16xf32>
    %c0_6 = arith.constant 0 : index
    %c0_7 = arith.constant 0 : index
    %4 = vector.load %arg4[%c0_6, %c0_7] : memref<32x1xf32, #tpu.memory_space<vmem>>, vector<32x1xf32>
    %5 = vector.shape_cast %4 : vector<32x1xf32> to vector<32x1xf32>
    %6 = vector.broadcast %5 : vector<32x1xf32> to vector<32x2xf32>
    %c0_8 = arith.constant 0 : index
    %c0_9 = arith.constant 0 : index
    %7 = vector.load %arg5[%c0_8, %c0_9] : memref<16x1xf32, #tpu.memory_space<vmem>>, vector<16x1xf32>
    %8 = vector.shape_cast %7 : vector<16x1xf32> to vector<16x1xf32>
    %9 = vector.broadcast %8 : vector<16x1xf32> to vector<16x2xf32>
    %c0_10 = arith.constant 0 : index
    %c0_11 = arith.constant 0 : index
    %10 = vector.load %arg6[%c0_10, %c0_11] : memref<16x1xf32, #tpu.memory_space<vmem>>, vector<16x1xf32>
    %11 = vector.shape_cast %10 : vector<16x1xf32> to vector<16x1xf32>
    %12 = vector.broadcast %11 : vector<16x1xf32> to vector<16x2xf32>
    %cst = arith.constant 0.000000e+00 : f32
    %13 = vector.broadcast %cst : f32 to vector<16x2xf32>
    %c0_i32 = arith.constant 0 : i32
    %14 = arith.index_cast %c0_i32 : i32 to index
    %c0_12 = arith.constant 0 : index
    %c0_13 = arith.constant 0 : index
    %15 = vector.load %arg1[%14, %c0_12, %c0_13] : memref<8x1x2xf32, #tpu.memory_space<vmem>>, vector<1x1x2xf32>
    %16 = vector.shape_cast %15 : vector<1x1x2xf32> to vector<1x2xf32>
    %cst_14 = arith.constant dense<0.000000e+00> : vector<32x2xf32>
    %17 = tpu.matmul %2, %13, %cst_14 {dimension_numbers = #tpu.dot_dimension_numbers<[1], [0], [0], [1], [0, 0, 1, 1], [], []>} : vector<32x16xf32>, vector<16x2xf32>, vector<32x2xf32> -> vector<32x2xf32>
    %cst_15 = arith.constant dense<0.000000e+00> : vector<16x2xf32>
    %18 = tpu.matmul %3, %13, %cst_15 {dimension_numbers = #tpu.dot_dimension_numbers<[1], [0], [0], [1], [0, 0, 1, 1], [], []>} : vector<16x16xf32>, vector<16x2xf32>, vector<16x2xf32> -> vector<16x2xf32>
    %19 = vector.broadcast %16 : vector<1x2xf32> to vector<32x2xf32>
    %20 = vector.broadcast %0 : vector<32x1xf32> to vector<32x2xf32>
    %21 = arith.mulf %19, %20 : vector<32x2xf32>
    %22 = arith.addf %21, %6 : vector<32x2xf32>
    %23 = vector.broadcast %16 : vector<1x2xf32> to vector<16x2xf32>
    %24 = vector.broadcast %1 : vector<16x1xf32> to vector<16x2xf32>
    %25 = arith.mulf %23, %24 : vector<16x2xf32>
    %26 = arith.addf %25, %9 : vector<16x2xf32>
    %27 = arith.addf %22, %17 : vector<32x2xf32>
    %28 = arith.negf %27 : vector<32x2xf32>
    %29 = math.exp %28 : vector<32x2xf32>
    %cst_16 = arith.constant 1.000000e+00 : f32
    %30 = vector.broadcast %cst_16 : f32 to vector<32x2xf32>
    %31 = arith.addf %30, %29 : vector<32x2xf32>
    %32 = arith.divf %30, %31 : vector<32x2xf32>
    %33 = vector.extract_strided_slice %32 {offsets = [0, 0], sizes = [16, 2], strides = [1, 1]} : vector<32x2xf32> to vector<16x2xf32>
    %34 = vector.extract_strided_slice %32 {offsets = [16, 0], sizes = [16, 2], strides = [1, 1]} : vector<32x2xf32> to vector<16x2xf32>
    %35 = arith.addf %18, %12 : vector<16x2xf32>
    %36 = arith.mulf %33, %35 : vector<16x2xf32>
    %37 = arith.addf %26, %36 : vector<16x2xf32>
    %38 = math.tanh %37 : vector<16x2xf32>
    %cst_17 = arith.constant 1.000000e+00 : f32
    %39 = vector.broadcast %cst_17 : f32 to vector<16x2xf32>
    %40 = arith.subf %39, %34 : vector<16x2xf32>
    %41 = arith.mulf %40, %38 : vector<16x2xf32>
    %42 = arith.mulf %34, %13 : vector<16x2xf32>
    %43 = arith.addf %41, %42 : vector<16x2xf32>
    %c1_i32 = arith.constant 1 : i32
    %44 = arith.index_cast %c1_i32 : i32 to index
    %c0_18 = arith.constant 0 : index
    %c0_19 = arith.constant 0 : index
    %45 = vector.load %arg1[%44, %c0_18, %c0_19] : memref<8x1x2xf32, #tpu.memory_space<vmem>>, vector<1x1x2xf32>
    %46 = vector.shape_cast %45 : vector<1x1x2xf32> to vector<1x2xf32>
    %cst_20 = arith.constant dense<0.000000e+00> : vector<32x2xf32>
    %47 = tpu.matmul %2, %43, %cst_20 {dimension_numbers = #tpu.dot_dimension_numbers<[1], [0], [0], [1], [0, 0, 1, 1], [], []>} : vector<32x16xf32>, vector<16x2xf32>, vector<32x2xf32> -> vector<32x2xf32>
    %cst_21 = arith.constant dense<0.000000e+00> : vector<16x2xf32>
    %48 = tpu.matmul %3, %43, %cst_21 {dimension_numbers = #tpu.dot_dimension_numbers<[1], [0], [0], [1], [0, 0, 1, 1], [], []>} : vector<16x16xf32>, vector<16x2xf32>, vector<16x2xf32> -> vector<16x2xf32>
    %49 = vector.broadcast %46 : vector<1x2xf32> to vector<32x2xf32>
    %50 = vector.broadcast %0 : vector<32x1xf32> to vector<32x2xf32>
    %51 = arith.mulf %49, %50 : vector<32x2xf32>
    %52 = arith.addf %51, %6 : vector<32x2xf32>
    %53 = vector.broadcast %46 : vector<1x2xf32> to vector<16x2xf32>
    %54 = vector.broadcast %1 : vector<16x1xf32> to vector<16x2xf32>
    %55 = arith.mulf %53, %54 : vector<16x2xf32>
    %56 = arith.addf %55, %9 : vector<16x2xf32>
    %57 = arith.addf %52, %47 : vector<32x2xf32>
    %58 = arith.negf %57 : vector<32x2xf32>
    %59 = math.exp %58 : vector<32x2xf32>
    %cst_22 = arith.constant 1.000000e+00 : f32
    %60 = vector.broadcast %cst_22 : f32 to vector<32x2xf32>
    %61 = arith.addf %60, %59 : vector<32x2xf32>
    %62 = arith.divf %60, %61 : vector<32x2xf32>
    %63 = vector.extract_strided_slice %62 {offsets = [0, 0], sizes = [16, 2], strides = [1, 1]} : vector<32x2xf32> to vector<16x2xf32>
    %64 = vector.extract_strided_slice %62 {offsets = [16, 0], sizes = [16, 2], strides = [1, 1]} : vector<32x2xf32> to vector<16x2xf32>
    %65 = arith.addf %48, %12 : vector<16x2xf32>
    %66 = arith.mulf %63, %65 : vector<16x2xf32>
    %67 = arith.addf %56, %66 : vector<16x2xf32>
    %68 = math.tanh %67 : vector<16x2xf32>
    %cst_23 = arith.constant 1.000000e+00 : f32
    %69 = vector.broadcast %cst_23 : f32 to vector<16x2xf32>
    %70 = arith.subf %69, %64 : vector<16x2xf32>
    %71 = arith.mulf %70, %68 : vector<16x2xf32>
    %72 = arith.mulf %64, %43 : vector<16x2xf32>
    %73 = arith.addf %71, %72 : vector<16x2xf32>
    %c2_i32 = arith.constant 2 : i32
    %74 = arith.index_cast %c2_i32 : i32 to index
    %c0_24 = arith.constant 0 : index
    %c0_25 = arith.constant 0 : index
    %75 = vector.load %arg1[%74, %c0_24, %c0_25] : memref<8x1x2xf32, #tpu.memory_space<vmem>>, vector<1x1x2xf32>
    %76 = vector.shape_cast %75 : vector<1x1x2xf32> to vector<1x2xf32>
    %cst_26 = arith.constant dense<0.000000e+00> : vector<32x2xf32>
    %77 = tpu.matmul %2, %73, %cst_26 {dimension_numbers = #tpu.dot_dimension_numbers<[1], [0], [0], [1], [0, 0, 1, 1], [], []>} : vector<32x16xf32>, vector<16x2xf32>, vector<32x2xf32> -> vector<32x2xf32>
    %cst_27 = arith.constant dense<0.000000e+00> : vector<16x2xf32>
    %78 = tpu.matmul %3, %73, %cst_27 {dimension_numbers = #tpu.dot_dimension_numbers<[1], [0], [0], [1], [0, 0, 1, 1], [], []>} : vector<16x16xf32>, vector<16x2xf32>, vector<16x2xf32> -> vector<16x2xf32>
    %79 = vector.broadcast %76 : vector<1x2xf32> to vector<32x2xf32>
    %80 = vector.broadcast %0 : vector<32x1xf32> to vector<32x2xf32>
    %81 = arith.mulf %79, %80 : vector<32x2xf32>
    %82 = arith.addf %81, %6 : vector<32x2xf32>
    %83 = vector.broadcast %76 : vector<1x2xf32> to vector<16x2xf32>
    %84 = vector.broadcast %1 : vector<16x1xf32> to vector<16x2xf32>
    %85 = arith.mulf %83, %84 : vector<16x2xf32>
    %86 = arith.addf %85, %9 : vector<16x2xf32>
    %87 = arith.addf %82, %77 : vector<32x2xf32>
    %88 = arith.negf %87 : vector<32x2xf32>
    %89 = math.exp %88 : vector<32x2xf32>
    %cst_28 = arith.constant 1.000000e+00 : f32
    %90 = vector.broadcast %cst_28 : f32 to vector<32x2xf32>
    %91 = arith.addf %90, %89 : vector<32x2xf32>
    %92 = arith.divf %90, %91 : vector<32x2xf32>
    %93 = vector.extract_strided_slice %92 {offsets = [0, 0], sizes = [16, 2], strides = [1, 1]} : vector<32x2xf32> to vector<16x2xf32>
    %94 = vector.extract_strided_slice %92 {offsets = [16, 0], sizes = [16, 2], strides = [1, 1]} : vector<32x2xf32> to vector<16x2xf32>
    %95 = arith.addf %78, %12 : vector<16x2xf32>
    %96 = arith.mulf %93, %95 : vector<16x2xf32>
    %97 = arith.addf %86, %96 : vector<16x2xf32>
    %98 = math.tanh %97 : vector<16x2xf32>
    %cst_29 = arith.constant 1.000000e+00 : f32
    %99 = vector.broadcast %cst_29 : f32 to vector<16x2xf32>
    %100 = arith.subf %99, %94 : vector<16x2xf32>
    %101 = arith.mulf %100, %98 : vector<16x2xf32>
    %102 = arith.mulf %94, %73 : vector<16x2xf32>
    %103 = arith.addf %101, %102 : vector<16x2xf32>
    %c3_i32 = arith.constant 3 : i32
    %104 = arith.index_cast %c3_i32 : i32 to index
    %c0_30 = arith.constant 0 : index
    %c0_31 = arith.constant 0 : index
    %105 = vector.load %arg1[%104, %c0_30, %c0_31] : memref<8x1x2xf32, #tpu.memory_space<vmem>>, vector<1x1x2xf32>
    %106 = vector.shape_cast %105 : vector<1x1x2xf32> to vector<1x2xf32>
    %cst_32 = arith.constant dense<0.000000e+00> : vector<32x2xf32>
    %107 = tpu.matmul %2, %103, %cst_32 {dimension_numbers = #tpu.dot_dimension_numbers<[1], [0], [0], [1], [0, 0, 1, 1], [], []>} : vector<32x16xf32>, vector<16x2xf32>, vector<32x2xf32> -> vector<32x2xf32>
    %cst_33 = arith.constant dense<0.000000e+00> : vector<16x2xf32>
    %108 = tpu.matmul %3, %103, %cst_33 {dimension_numbers = #tpu.dot_dimension_numbers<[1], [0], [0], [1], [0, 0, 1, 1], [], []>} : vector<16x16xf32>, vector<16x2xf32>, vector<16x2xf32> -> vector<16x2xf32>
    %109 = vector.broadcast %106 : vector<1x2xf32> to vector<32x2xf32>
    %110 = vector.broadcast %0 : vector<32x1xf32> to vector<32x2xf32>
    %111 = arith.mulf %109, %110 : vector<32x2xf32>
    %112 = arith.addf %111, %6 : vector<32x2xf32>
    %113 = vector.broadcast %106 : vector<1x2xf32> to vector<16x2xf32>
    %114 = vector.broadcast %1 : vector<16x1xf32> to vector<16x2xf32>
    %115 = arith.mulf %113, %114 : vector<16x2xf32>
    %116 = arith.addf %115, %9 : vector<16x2xf32>
    %117 = arith.addf %112, %107 : vector<32x2xf32>
    %118 = arith.negf %117 : vector<32x2xf32>
    %119 = math.exp %118 : vector<32x2xf32>
    %cst_34 = arith.constant 1.000000e+00 : f32
    %120 = vector.broadcast %cst_34 : f32 to vector<32x2xf32>
    %121 = arith.addf %120, %119 : vector<32x2xf32>
    %122 = arith.divf %120, %121 : vector<32x2xf32>
    %123 = vector.extract_strided_slice %122 {offsets = [0, 0], sizes = [16, 2], strides = [1, 1]} : vector<32x2xf32> to vector<16x2xf32>
    %124 = vector.extract_strided_slice %122 {offsets = [16, 0], sizes = [16, 2], strides = [1, 1]} : vector<32x2xf32> to vector<16x2xf32>
    %125 = arith.addf %108, %12 : vector<16x2xf32>
    %126 = arith.mulf %123, %125 : vector<16x2xf32>
    %127 = arith.addf %116, %126 : vector<16x2xf32>
    %128 = math.tanh %127 : vector<16x2xf32>
    %cst_35 = arith.constant 1.000000e+00 : f32
    %129 = vector.broadcast %cst_35 : f32 to vector<16x2xf32>
    %130 = arith.subf %129, %124 : vector<16x2xf32>
    %131 = arith.mulf %130, %128 : vector<16x2xf32>
    %132 = arith.mulf %124, %103 : vector<16x2xf32>
    %133 = arith.addf %131, %132 : vector<16x2xf32>
    %c4_i32 = arith.constant 4 : i32
    %134 = arith.index_cast %c4_i32 : i32 to index
    %c0_36 = arith.constant 0 : index
    %c0_37 = arith.constant 0 : index
    %135 = vector.load %arg1[%134, %c0_36, %c0_37] : memref<8x1x2xf32, #tpu.memory_space<vmem>>, vector<1x1x2xf32>
    %136 = vector.shape_cast %135 : vector<1x1x2xf32> to vector<1x2xf32>
    %cst_38 = arith.constant dense<0.000000e+00> : vector<32x2xf32>
    %137 = tpu.matmul %2, %133, %cst_38 {dimension_numbers = #tpu.dot_dimension_numbers<[1], [0], [0], [1], [0, 0, 1, 1], [], []>} : vector<32x16xf32>, vector<16x2xf32>, vector<32x2xf32> -> vector<32x2xf32>
    %cst_39 = arith.constant dense<0.000000e+00> : vector<16x2xf32>
    %138 = tpu.matmul %3, %133, %cst_39 {dimension_numbers = #tpu.dot_dimension_numbers<[1], [0], [0], [1], [0, 0, 1, 1], [], []>} : vector<16x16xf32>, vector<16x2xf32>, vector<16x2xf32> -> vector<16x2xf32>
    %139 = vector.broadcast %136 : vector<1x2xf32> to vector<32x2xf32>
    %140 = vector.broadcast %0 : vector<32x1xf32> to vector<32x2xf32>
    %141 = arith.mulf %139, %140 : vector<32x2xf32>
    %142 = arith.addf %141, %6 : vector<32x2xf32>
    %143 = vector.broadcast %136 : vector<1x2xf32> to vector<16x2xf32>
    %144 = vector.broadcast %1 : vector<16x1xf32> to vector<16x2xf32>
    %145 = arith.mulf %143, %144 : vector<16x2xf32>
    %146 = arith.addf %145, %9 : vector<16x2xf32>
    %147 = arith.addf %142, %137 : vector<32x2xf32>
    %148 = arith.negf %147 : vector<32x2xf32>
    %149 = math.exp %148 : vector<32x2xf32>
    %cst_40 = arith.constant 1.000000e+00 : f32
    %150 = vector.broadcast %cst_40 : f32 to vector<32x2xf32>
    %151 = arith.addf %150, %149 : vector<32x2xf32>
    %152 = arith.divf %150, %151 : vector<32x2xf32>
    %153 = vector.extract_strided_slice %152 {offsets = [0, 0], sizes = [16, 2], strides = [1, 1]} : vector<32x2xf32> to vector<16x2xf32>
    %154 = vector.extract_strided_slice %152 {offsets = [16, 0], sizes = [16, 2], strides = [1, 1]} : vector<32x2xf32> to vector<16x2xf32>
    %155 = arith.addf %138, %12 : vector<16x2xf32>
    %156 = arith.mulf %153, %155 : vector<16x2xf32>
    %157 = arith.addf %146, %156 : vector<16x2xf32>
    %158 = math.tanh %157 : vector<16x2xf32>
    %cst_41 = arith.constant 1.000000e+00 : f32
    %159 = vector.broadcast %cst_41 : f32 to vector<16x2xf32>
    %160 = arith.subf %159, %154 : vector<16x2xf32>
    %161 = arith.mulf %160, %158 : vector<16x2xf32>
    %162 = arith.mulf %154, %133 : vector<16x2xf32>
    %163 = arith.addf %161, %162 : vector<16x2xf32>
    %c5_i32 = arith.constant 5 : i32
    %164 = arith.index_cast %c5_i32 : i32 to index
    %c0_42 = arith.constant 0 : index
    %c0_43 = arith.constant 0 : index
    %165 = vector.load %arg1[%164, %c0_42, %c0_43] : memref<8x1x2xf32, #tpu.memory_space<vmem>>, vector<1x1x2xf32>
    %166 = vector.shape_cast %165 : vector<1x1x2xf32> to vector<1x2xf32>
    %cst_44 = arith.constant dense<0.000000e+00> : vector<32x2xf32>
    %167 = tpu.matmul %2, %163, %cst_44 {dimension_numbers = #tpu.dot_dimension_numbers<[1], [0], [0], [1], [0, 0, 1, 1], [], []>} : vector<32x16xf32>, vector<16x2xf32>, vector<32x2xf32> -> vector<32x2xf32>
    %cst_45 = arith.constant dense<0.000000e+00> : vector<16x2xf32>
    %168 = tpu.matmul %3, %163, %cst_45 {dimension_numbers = #tpu.dot_dimension_numbers<[1], [0], [0], [1], [0, 0, 1, 1], [], []>} : vector<16x16xf32>, vector<16x2xf32>, vector<16x2xf32> -> vector<16x2xf32>
    %169 = vector.broadcast %166 : vector<1x2xf32> to vector<32x2xf32>
    %170 = vector.broadcast %0 : vector<32x1xf32> to vector<32x2xf32>
    %171 = arith.mulf %169, %170 : vector<32x2xf32>
    %172 = arith.addf %171, %6 : vector<32x2xf32>
    %173 = vector.broadcast %166 : vector<1x2xf32> to vector<16x2xf32>
    %174 = vector.broadcast %1 : vector<16x1xf32> to vector<16x2xf32>
    %175 = arith.mulf %173, %174 : vector<16x2xf32>
    %176 = arith.addf %175, %9 : vector<16x2xf32>
    %177 = arith.addf %172, %167 : vector<32x2xf32>
    %178 = arith.negf %177 : vector<32x2xf32>
    %179 = math.exp %178 : vector<32x2xf32>
    %cst_46 = arith.constant 1.000000e+00 : f32
    %180 = vector.broadcast %cst_46 : f32 to vector<32x2xf32>
    %181 = arith.addf %180, %179 : vector<32x2xf32>
    %182 = arith.divf %180, %181 : vector<32x2xf32>
    %183 = vector.extract_strided_slice %182 {offsets = [0, 0], sizes = [16, 2], strides = [1, 1]} : vector<32x2xf32> to vector<16x2xf32>
    %184 = vector.extract_strided_slice %182 {offsets = [16, 0], sizes = [16, 2], strides = [1, 1]} : vector<32x2xf32> to vector<16x2xf32>
    %185 = arith.addf %168, %12 : vector<16x2xf32>
    %186 = arith.mulf %183, %185 : vector<16x2xf32>
    %187 = arith.addf %176, %186 : vector<16x2xf32>
    %188 = math.tanh %187 : vector<16x2xf32>
    %cst_47 = arith.constant 1.000000e+00 : f32
    %189 = vector.broadcast %cst_47 : f32 to vector<16x2xf32>
    %190 = arith.subf %189, %184 : vector<16x2xf32>
    %191 = arith.mulf %190, %188 : vector<16x2xf32>
    %192 = arith.mulf %184, %163 : vector<16x2xf32>
    %193 = arith.addf %191, %192 : vector<16x2xf32>
    %c6_i32 = arith.constant 6 : i32
    %194 = arith.index_cast %c6_i32 : i32 to index
    %c0_48 = arith.constant 0 : index
    %c0_49 = arith.constant 0 : index
    %195 = vector.load %arg1[%194, %c0_48, %c0_49] : memref<8x1x2xf32, #tpu.memory_space<vmem>>, vector<1x1x2xf32>
    %196 = vector.shape_cast %195 : vector<1x1x2xf32> to vector<1x2xf32>
    %cst_50 = arith.constant dense<0.000000e+00> : vector<32x2xf32>
    %197 = tpu.matmul %2, %193, %cst_50 {dimension_numbers = #tpu.dot_dimension_numbers<[1], [0], [0], [1], [0, 0, 1, 1], [], []>} : vector<32x16xf32>, vector<16x2xf32>, vector<32x2xf32> -> vector<32x2xf32>
    %cst_51 = arith.constant dense<0.000000e+00> : vector<16x2xf32>
    %198 = tpu.matmul %3, %193, %cst_51 {dimension_numbers = #tpu.dot_dimension_numbers<[1], [0], [0], [1], [0, 0, 1, 1], [], []>} : vector<16x16xf32>, vector<16x2xf32>, vector<16x2xf32> -> vector<16x2xf32>
    %199 = vector.broadcast %196 : vector<1x2xf32> to vector<32x2xf32>
    %200 = vector.broadcast %0 : vector<32x1xf32> to vector<32x2xf32>
    %201 = arith.mulf %199, %200 : vector<32x2xf32>
    %202 = arith.addf %201, %6 : vector<32x2xf32>
    %203 = vector.broadcast %196 : vector<1x2xf32> to vector<16x2xf32>
    %204 = vector.broadcast %1 : vector<16x1xf32> to vector<16x2xf32>
    %205 = arith.mulf %203, %204 : vector<16x2xf32>
    %206 = arith.addf %205, %9 : vector<16x2xf32>
    %207 = arith.addf %202, %197 : vector<32x2xf32>
    %208 = arith.negf %207 : vector<32x2xf32>
    %209 = math.exp %208 : vector<32x2xf32>
    %cst_52 = arith.constant 1.000000e+00 : f32
    %210 = vector.broadcast %cst_52 : f32 to vector<32x2xf32>
    %211 = arith.addf %210, %209 : vector<32x2xf32>
    %212 = arith.divf %210, %211 : vector<32x2xf32>
    %213 = vector.extract_strided_slice %212 {offsets = [0, 0], sizes = [16, 2], strides = [1, 1]} : vector<32x2xf32> to vector<16x2xf32>
    %214 = vector.extract_strided_slice %212 {offsets = [16, 0], sizes = [16, 2], strides = [1, 1]} : vector<32x2xf32> to vector<16x2xf32>
    %215 = arith.addf %198, %12 : vector<16x2xf32>
    %216 = arith.mulf %213, %215 : vector<16x2xf32>
    %217 = arith.addf %206, %216 : vector<16x2xf32>
    %218 = math.tanh %217 : vector<16x2xf32>
    %cst_53 = arith.constant 1.000000e+00 : f32
    %219 = vector.broadcast %cst_53 : f32 to vector<16x2xf32>
    %220 = arith.subf %219, %214 : vector<16x2xf32>
    %221 = arith.mulf %220, %218 : vector<16x2xf32>
    %222 = arith.mulf %214, %193 : vector<16x2xf32>
    %223 = arith.addf %221, %222 : vector<16x2xf32>
    %c7_i32 = arith.constant 7 : i32
    %224 = arith.index_cast %c7_i32 : i32 to index
    %c0_54 = arith.constant 0 : index
    %c0_55 = arith.constant 0 : index
    %225 = vector.load %arg1[%224, %c0_54, %c0_55] : memref<8x1x2xf32, #tpu.memory_space<vmem>>, vector<1x1x2xf32>
    %226 = vector.shape_cast %225 : vector<1x1x2xf32> to vector<1x2xf32>
    %cst_56 = arith.constant dense<0.000000e+00> : vector<32x2xf32>
    %227 = tpu.matmul %2, %223, %cst_56 {dimension_numbers = #tpu.dot_dimension_numbers<[1], [0], [0], [1], [0, 0, 1, 1], [], []>} : vector<32x16xf32>, vector<16x2xf32>, vector<32x2xf32> -> vector<32x2xf32>
    %cst_57 = arith.constant dense<0.000000e+00> : vector<16x2xf32>
    %228 = tpu.matmul %3, %223, %cst_57 {dimension_numbers = #tpu.dot_dimension_numbers<[1], [0], [0], [1], [0, 0, 1, 1], [], []>} : vector<16x16xf32>, vector<16x2xf32>, vector<16x2xf32> -> vector<16x2xf32>
    %229 = vector.broadcast %226 : vector<1x2xf32> to vector<32x2xf32>
    %230 = vector.broadcast %0 : vector<32x1xf32> to vector<32x2xf32>
    %231 = arith.mulf %229, %230 : vector<32x2xf32>
    %232 = arith.addf %231, %6 : vector<32x2xf32>
    %233 = vector.broadcast %226 : vector<1x2xf32> to vector<16x2xf32>
    %234 = vector.broadcast %1 : vector<16x1xf32> to vector<16x2xf32>
    %235 = arith.mulf %233, %234 : vector<16x2xf32>
    %236 = arith.addf %235, %9 : vector<16x2xf32>
    %237 = arith.addf %232, %227 : vector<32x2xf32>
    %238 = arith.negf %237 : vector<32x2xf32>
    %239 = math.exp %238 : vector<32x2xf32>
    %cst_58 = arith.constant 1.000000e+00 : f32
    %240 = vector.broadcast %cst_58 : f32 to vector<32x2xf32>
    %241 = arith.addf %240, %239 : vector<32x2xf32>
    %242 = arith.divf %240, %241 : vector<32x2xf32>
    %243 = vector.extract_strided_slice %242 {offsets = [0, 0], sizes = [16, 2], strides = [1, 1]} : vector<32x2xf32> to vector<16x2xf32>
    %244 = vector.extract_strided_slice %242 {offsets = [16, 0], sizes = [16, 2], strides = [1, 1]} : vector<32x2xf32> to vector<16x2xf32>
    %245 = arith.addf %228, %12 : vector<16x2xf32>
    %246 = arith.mulf %243, %245 : vector<16x2xf32>
    %247 = arith.addf %236, %246 : vector<16x2xf32>
    %248 = math.tanh %247 : vector<16x2xf32>
    %cst_59 = arith.constant 1.000000e+00 : f32
    %249 = vector.broadcast %cst_59 : f32 to vector<16x2xf32>
    %250 = arith.subf %249, %244 : vector<16x2xf32>
    %251 = arith.mulf %250, %248 : vector<16x2xf32>
    %252 = arith.mulf %244, %223 : vector<16x2xf32>
    %253 = arith.addf %251, %252 : vector<16x2xf32>
    %c8_i32 = arith.constant 8 : i32
    %cst_60 = arith.constant 0.000000e+00 : f32
    %254 = vector.broadcast %cst_60 : f32 to vector<16x2xf32>
    %255 = arith.maximumf %253, %254 : vector<16x2xf32>
    %c0_61 = arith.constant 0 : index
    %c0_62 = arith.constant 0 : index
    %256 = vector.load %arg7[%c0_61, %c0_62] : memref<5x16xf32, #tpu.memory_space<vmem>>, vector<5x16xf32>
    %cst_63 = arith.constant dense<0.000000e+00> : vector<5x2xf32>
    %257 = tpu.matmul %256, %255, %cst_63 {dimension_numbers = #tpu.dot_dimension_numbers<[1], [0], [0], [1], [0, 0, 1, 1], [], []>} : vector<5x16xf32>, vector<16x2xf32>, vector<5x2xf32> -> vector<5x2xf32>
    %c0_64 = arith.constant 0 : index
    %c0_65 = arith.constant 0 : index
    %258 = vector.load %arg8[%c0_64, %c0_65] : memref<5x1xf32, #tpu.memory_space<vmem>>, vector<5x1xf32>
    %259 = vector.broadcast %258 : vector<5x1xf32> to vector<5x2xf32>
    %260 = arith.addf %257, %259 : vector<5x2xf32>
    %c0_66 = arith.constant 0 : index
    %c0_67 = arith.constant 0 : index
    %261 = vector.load %arg9[%c0_66, %c0_67] : memref<5x2xf32, #tpu.memory_space<vmem>>, vector<5x2xf32>
    tpu.vector_store %arg9[%c0_66, %c0_67], %260 {strides = array<i32>} : memref<5x2xf32, #tpu.memory_space<vmem>>, vector<5x2xf32>,
    return
  }
  func.func @transform_0(%arg0: i32) -> (i32, i32, i32) {
    %c0_i32 = arith.constant 0 : i32
    %c0_i32_0 = arith.constant 0 : i32
    %c0_i32_1 = arith.constant 0 : i32
    return %c0_i32, %c0_i32_0, %arg0 : i32, i32, i32
  }
  func.func @transform_1(%arg0: i32) -> (i32, i32) {
    %c0_i32 = arith.constant 0 : i32
    %c0_i32_0 = arith.constant 0 : i32
    %c0_i32_1 = arith.constant 0 : i32
    return %c0_i32, %c0_i32_0 : i32, i32
  }
  func.func @transform_2(%arg0: i32) -> (i32, i32) {
    %c0_i32 = arith.constant 0 : i32
    %c0_i32_0 = arith.constant 0 : i32
    %c0_i32_1 = arith.constant 0 : i32
    return %c0_i32, %c0_i32_0 : i32, i32
  }
  func.func @transform_3(%arg0: i32) -> (i32, i32) {
    %c0_i32 = arith.constant 0 : i32
    %c0_i32_0 = arith.constant 0 : i32
    %c0_i32_1 = arith.constant 0 : i32
    return %c0_i32, %c0_i32_0 : i32, i32
  }
  func.func @transform_4(%arg0: i32) -> (i32, i32) {
    %c0_i32 = arith.constant 0 : i32
    %c0_i32_0 = arith.constant 0 : i32
    %c0_i32_1 = arith.constant 0 : i32
    return %c0_i32, %c0_i32_0 : i32, i32
  }
  func.func @transform_5(%arg0: i32) -> (i32, i32) {
    %c0_i32 = arith.constant 0 : i32
    %c0_i32_0 = arith.constant 0 : i32
    %c0_i32_1 = arith.constant 0 : i32
    return %c0_i32, %c0_i32_0 : i32, i32
  }
  func.func @transform_6(%arg0: i32) -> (i32, i32) {
    %c0_i32 = arith.constant 0 : i32
    %c0_i32_0 = arith.constant 0 : i32
    %c0_i32_1 = arith.constant 0 : i32
    return %c0_i32, %c0_i32_0 : i32, i32
  }
  func.func @transform_7(%arg0: i32) -> (i32, i32) {
    %c0_i32 = arith.constant 0 : i32
    %c0_i32_0 = arith.constant 0 : i32
    %c0_i32_1 = arith.constant 0 : i32
    return %c0_i32, %c0_i32_0 : i32, i32
  }
  func.func @transform_8(%arg0: i32) -> (i32, i32) {
    %c0_i32 = arith.constant 0 : i32
    %c0_i32_0 = arith.constant 0 : i32
    return %c0_i32, %arg0 : i32, i32
  }
}

</mosaic_0001>

<llo_original>
// kernel: tpu_custom_call.1
$region0: #{tpu_custom_call.1}
  #allocation0 [shape = 'u32[]', space=smem, size = 0x4, offset = 0x4, fixed_abs, tag = 'smem constant byte address 0x4 - core index']
  #allocation1 [shape = 'u32[72,128]{1,0:T(1,128)}', space=vmem, size = 0x9000, scoped, tag = 'internal scratch']
  %s0 = inlined_call_operand.vmem [shape: f32[8,1,2], index: 0, kind: input, shape index: {}]
  %s1 = inlined_call_operand.vmem [shape: f32[48,1], index: 1, kind: input, shape index: {}]
  %s2 = inlined_call_operand.vmem [shape: f32[48,16], index: 2, kind: input, shape index: {}]
  %s3 = inlined_call_operand.vmem [shape: f32[32,1], index: 3, kind: input, shape index: {}]
  %s4 = inlined_call_operand.vmem [shape: f32[16,1], index: 4, kind: input, shape index: {}]
  %s5 = inlined_call_operand.vmem [shape: f32[16,1], index: 5, kind: input, shape index: {}]
  %s6 = inlined_call_operand.vmem [shape: f32[5,16], index: 6, kind: input, shape index: {}]
  %s7 = inlined_call_operand.vmem [shape: f32[5,1], index: 7, kind: input, shape index: {}]
  %s8 = inlined_call_operand.vmem [shape: f32[5,2], index: 8, kind: output, shape index: {}]
  %s9 = sld [smem:[#allocation0]]
  $region42: #{tpu_custom_call.1} parent=0
    _
  %s11 = ssub.s32 1, %s9
  %s12 = scalar_select 0, %s11, %s9
  // Predicated region
  $region2: #{tpu_custom_call.1} parent=0 // pred_check
    _
  $region3: #{tpu_custom_call.1} parent=0 // pred_check_branch
    %14 = sbr.rel (0) target = $region5
  $region4: #{tpu_custom_call.1} parent=0 // pred_region
    _
  $region5: #{tpu_custom_call.1} parent=0 // pred_fallthru
    _
  // Predicated region
  $region6: #{tpu_custom_call.1} parent=0 // pred_check
    _
  $region7: #{tpu_custom_call.1} parent=0 // pred_check_branch
    %16 = sbr.rel (0) target = $region9
  $region8: #{tpu_custom_call.1} parent=0 // pred_region
    _
  $region9: #{tpu_custom_call.1} parent=0 // pred_fallthru
    _
  // Predicated region
  $region10: #{tpu_custom_call.1} parent=0 // pred_check
    _
  $region11: #{tpu_custom_call.1} parent=0 // pred_check_branch
    %18 = sbr.rel (0) target = $region13
  $region12: #{tpu_custom_call.1} parent=0 // pred_region
    _
  $region13: #{tpu_custom_call.1} parent=0 // pred_fallthru
    _
  // Predicated region
  $region14: #{tpu_custom_call.1} parent=0 // pred_check
    _
  $region15: #{tpu_custom_call.1} parent=0 // pred_check_branch
    %20 = sbr.rel (0) target = $region17
  $region16: #{tpu_custom_call.1} parent=0 // pred_region
    _
  $region17: #{tpu_custom_call.1} parent=0 // pred_fallthru
    _
  // Predicated region
  $region18: #{tpu_custom_call.1} parent=0 // pred_check
    _
  $region19: #{tpu_custom_call.1} parent=0 // pred_check_branch
    %22 = sbr.rel (0) target = $region21
  $region20: #{tpu_custom_call.1} parent=0 // pred_region
    _
  $region21: #{tpu_custom_call.1} parent=0 // pred_fallthru
    _
  // Predicated region
  $region22: #{tpu_custom_call.1} parent=0 // pred_check
    _
  $region23: #{tpu_custom_call.1} parent=0 // pred_check_branch
    %24 = sbr.rel (0) target = $region25
  $region24: #{tpu_custom_call.1} parent=0 // pred_region
    _
  $region25: #{tpu_custom_call.1} parent=0 // pred_fallthru
    _
  // Predicated region
  $region26: #{tpu_custom_call.1} parent=0 // pred_check
    _
  $region27: #{tpu_custom_call.1} parent=0 // pred_check_branch
    %26 = sbr.rel (0) target = $region29
  $region28: #{tpu_custom_call.1} parent=0 // pred_region
    _
  $region29: #{tpu_custom_call.1} parent=0 // pred_fallthru
    _
  // Predicated region
  $region30: #{tpu_custom_call.1} parent=0 // pred_check
    _
  $region31: #{tpu_custom_call.1} parent=0 // pred_check_branch
    %28 = sbr.rel (0) target = $region33
  $region32: #{tpu_custom_call.1} parent=0 // pred_region
    _
  $region33: #{tpu_custom_call.1} parent=0 // pred_fallthru
    _
  %v29 = vld [vmem:[%s1] sm:$0xff]
  %v30 = vld [vmem:[%s1 + $0x8] sm:$0xff]
  %v31 = vld [vmem:[%s1 + $0x10] sm:$0xff]
  %v32 = vld [vmem:[%s1 + $0x18] sm:$0xff]
  %v33 = vld [vmem:[%s1 + $0x20] sm:$0xff]
  %v34 = vld [vmem:[%s1 + $0x28] sm:$0xff]
  %v35 = vld [vmem:[%s2] sm:$0xff]
  %v36 = vld [vmem:[%s2 + $0x8] sm:$0xff]
  %v37 = vld [vmem:[%s2 + $0x10] sm:$0xff]
  %v38 = vld [vmem:[%s2 + $0x18] sm:$0xff]
  %v39 = vld [vmem:[%s2 + $0x20] sm:$0xff]
  %v40 = vld [vmem:[%s2 + $0x28] sm:$0xff]
  %v41 = vld [vmem:[%s3] sm:$0xff]
  %v42 = vld [vmem:[%s3 + $0x8] sm:$0xff]
  %v43 = vld [vmem:[%s3 + $0x10] sm:$0xff]
  %v44 = vld [vmem:[%s3 + $0x18] sm:$0xff]
  %46 = vset.pattern.permute.xlu0 0
  %47 = vperm.xlu0 %46, %v41
  %v48 = vpop.permute.xlu0 %47
  %51 = vset.pattern.permute.xlu0 0
  %52 = vperm.xlu0 %51, %v42
  %v53 = vpop.permute.xlu0 %52
  %56 = vset.pattern.permute.xlu0 0
  %57 = vperm.xlu0 %56, %v43
  %v58 = vpop.permute.xlu0 %57
  %61 = vset.pattern.permute.xlu0 0
  %62 = vperm.xlu0 %61, %v44
  %v63 = vpop.permute.xlu0 %62
  %v65 = vld [vmem:[%s4] sm:$0xff]
  %v66 = vld [vmem:[%s4 + $0x8] sm:$0xff]
  %68 = vset.pattern.permute.xlu0 0
  %69 = vperm.xlu0 %68, %v65
  %v70 = vpop.permute.xlu0 %69
  %73 = vset.pattern.permute.xlu0 0
  %74 = vperm.xlu0 %73, %v66
  %v75 = vpop.permute.xlu0 %74
  %v77 = vld [vmem:[%s5] sm:$0xff]
  %v78 = vld [vmem:[%s5 + $0x8] sm:$0xff]
  %80 = vset.pattern.permute.xlu0 0
  %81 = vperm.xlu0 %80, %v77
  %v82 = vpop.permute.xlu0 %81
  %85 = vset.pattern.permute.xlu0 0
  %86 = vperm.xlu0 %85, %v78
  %v87 = vpop.permute.xlu0 %86
  %v89 = vld [vmem:[%s0] sm:$0x1]
  %vm90 = vcmask 130048
  %v92 = vsel %vm90, %v35, 0
  %v95 = vsel %vm90, %v36, 0
  %v98 = vsel %vm90, %v37, 0
  %v101 = vsel %vm90, %v38, 0
  %103 = vmatpush.msra.mxu0 0.0
  %104 = vmatpush.msra.mxu0 0.0
  %105 = vmatpush.msra.mxu0 0.0
  %106 = vmatpush.msra.mxu0 0.0
  %107 = vmatpush.msra.mxu0 0.0
  %108 = vmatpush.msra.mxu0 0.0
  %109 = vmatpush.msra.mxu0 0.0
  %110 = vmatpush.msra.mxu0 0.0
  %111 = vmatpush.msra.mxu0 0.0
  %112 = vmatpush.msra.mxu0 0.0
  %113 = vmatpush.msra.mxu0 0.0
  %114 = vmatpush.msra.mxu0 0.0
  %115 = vmatpush.msra.mxu0 0.0
  %116 = vmatpush.msra.mxu0 0.0
  %117 = vmatpush.msra.mxu0 0.0
  %118 = vmatpush.msra.mxu0 0.0
  %119 = vmatmul.f32.gmra.mxu0 %v92
  %v120 = vpop.f32.mrf.mxu0
  %v121 = vadd.f32 0.0, %v120
  %122 = vmatmul.f32.gmra.mxu0 %v95
  %v123 = vpop.f32.mrf.mxu0
  %v124 = vadd.f32 0.0, %v123
  %125 = vmatmul.f32.gmra.mxu0 %v98
  %v126 = vpop.f32.mrf.mxu0
  %v127 = vadd.f32 0.0, %v126
  %128 = vmatmul.f32.gmra.mxu0 %v101
  %v129 = vpop.f32.mrf.mxu0
  %v130 = vadd.f32 0.0, %v129
  %131 = vdwg.mxu0
  %v133 = vperm.slane %v89, 0
  %136 = vset.pattern.permute.xlu0 0
  %137 = vperm.xlu0 %136, %v29
  %v138 = vpop.permute.xlu0 %137
  %141 = vset.pattern.permute.xlu0 0
  %142 = vperm.xlu0 %141, %v30
  %v143 = vpop.permute.xlu0 %142
  %146 = vset.pattern.permute.xlu0 0
  %147 = vperm.xlu0 %146, %v31
  %v148 = vpop.permute.xlu0 %147
  %151 = vset.pattern.permute.xlu0 0
  %152 = vperm.xlu0 %151, %v32
  %v153 = vpop.permute.xlu0 %152
  %v155 = vmul.f32 %v133, %v138
  %v156 = vmul.f32 %v133, %v143
  %v157 = vmul.f32 %v133, %v148
  %v158 = vmul.f32 %v133, %v153
  %v159 = vadd.f32 %v155, %v48
  %v160 = vadd.f32 %v156, %v53
  %v161 = vadd.f32 %v157, %v58
  %v162 = vadd.f32 %v158, %v63
  %164 = vset.pattern.permute.xlu0 0
  %165 = vperm.xlu0 %164, %v33
  %v166 = vpop.permute.xlu0 %165
  %169 = vset.pattern.permute.xlu0 0
  %170 = vperm.xlu0 %169, %v34
  %v171 = vpop.permute.xlu0 %170
  %v173 = vmul.f32 %v133, %v166
  %v174 = vmul.f32 %v133, %v171
  %v175 = vadd.f32 %v173, %v70
  %v176 = vadd.f32 %v174, %v75
  %v177 = vadd.f32 %v159, %v121
  %v178 = vadd.f32 %v160, %v124
  %v179 = vadd.f32 %v161, %v127
  %v180 = vadd.f32 %v162, %v130
  %v181 = vxor.u32 %v177, 2147483648
  %v182 = vxor.u32 %v178, 2147483648
  %v183 = vxor.u32 %v179, 2147483648
  %v184 = vxor.u32 %v180, 2147483648
  %v185 = vmul.f32 %v181, 1.442695
  %v186 = vpow.pop %v185
  %v187 = vmul.f32 %v182, 1.442695
  %v188 = vpow.pop %v187
  %v189 = vmul.f32 %v183, 1.442695
  %v190 = vpow.pop %v189
  %v191 = vmul.f32 %v184, 1.442695
  %v192 = vpow.pop %v191
  %v193 = vadd.f32 %v186, 1.0
  %v194 = vadd.f32 %v188, 1.0
  %v195 = vadd.f32 %v190, 1.0
  %v196 = vadd.f32 %v192, 1.0
  %v197 = vrcp.pop %v193
  %v198 = vmul.f32 %v193, %v197
  %v199 = vsub.f32 1.0, %v198
  %v200 = vmul.f32 %v197, %v199
  %v201 = vadd.f32 %v197, %v200
  %vm202 = vweird.f32 %v193
  %vm203 = vweird.f32 %v197
  %vm204 = vmor %vm202, %vm203
  %v205 = vsel %vm204, %v197, %v201
  %v206 = vand.u32 2147483647, %v193
  %vm207 = vcmp.eq.f32.partialorder %v206, 8.507059e+37
  %v208 = vand.u32 %v193, 2147483648
  %v209 = vor.u32 1.1754944e-38, %v208
  %v210 = vsel %vm207, %v209, %v205
  %v211 = vmul.f32 1.0, %v210
  %v212 = vrcp.pop %v194
  %v213 = vmul.f32 %v194, %v212
  %v214 = vsub.f32 1.0, %v213
  %v215 = vmul.f32 %v212, %v214
  %v216 = vadd.f32 %v212, %v215
  %vm217 = vweird.f32 %v194
  %vm218 = vweird.f32 %v212
  %vm219 = vmor %vm217, %vm218
  %v220 = vsel %vm219, %v212, %v216
  %v221 = vand.u32 2147483647, %v194
  %vm222 = vcmp.eq.f32.partialorder %v221, 8.507059e+37
  %v223 = vand.u32 %v194, 2147483648
  %v224 = vor.u32 1.1754944e-38, %v223
  %v225 = vsel %vm222, %v224, %v220
  %v226 = vmul.f32 1.0, %v225
  %v227 = vrcp.pop %v195
  %v228 = vmul.f32 %v195, %v227
  %v229 = vsub.f32 1.0, %v228
  %v230 = vmul.f32 %v227, %v229
  %v231 = vadd.f32 %v227, %v230
  %vm232 = vweird.f32 %v195
  %vm233 = vweird.f32 %v227
  %vm234 = vmor %vm232, %vm233
  %v235 = vsel %vm234, %v227, %v231
  %v236 = vand.u32 2147483647, %v195
  %vm237 = vcmp.eq.f32.partialorder %v236, 8.507059e+37
  %v238 = vand.u32 %v195, 2147483648
  %v239 = vor.u32 1.1754944e-38, %v238
  %v240 = vsel %vm237, %v239, %v235
  %v241 = vmul.f32 1.0, %v240
  %v242 = vrcp.pop %v196
  %v243 = vmul.f32 %v196, %v242
  %v244 = vsub.f32 1.0, %v243
  %v245 = vmul.f32 %v242, %v244
  %v246 = vadd.f32 %v242, %v245
  %vm247 = vweird.f32 %v196
  %vm248 = vweird.f32 %v242
  %vm249 = vmor %vm247, %vm248
  %v250 = vsel %vm249, %v242, %v246
  %v251 = vand.u32 2147483647, %v196
  %vm252 = vcmp.eq.f32.partialorder %v251, 8.507059e+37
  %v253 = vand.u32 %v196, 2147483648
  %v254 = vor.u32 1.1754944e-38, %v253
  %v255 = vsel %vm252, %v254, %v250
  %v256 = vmul.f32 1.0, %v255
  %v258 = vsel %vm90, %v39, 0
  %v261 = vsel %vm90, %v40, 0
  %263 = vmatpush.msra.mxu0 0.0
  %264 = vmatpush.msra.mxu0 0.0
  %265 = vmatpush.msra.mxu0 0.0
  %266 = vmatpush.msra.mxu0 0.0
  %267 = vmatpush.msra.mxu0 0.0
  %268 = vmatpush.msra.mxu0 0.0
  %269 = vmatpush.msra.mxu0 0.0
  %270 = vmatpush.msra.mxu0 0.0
  %271 = vmatpush.msra.mxu0 0.0
  %272 = vmatpush.msra.mxu0 0.0
  %273 = vmatpush.msra.mxu0 0.0
  %274 = vmatpush.msra.mxu0 0.0
  %275 = vmatpush.msra.mxu0 0.0
  %276 = vmatpush.msra.mxu0 0.0
  %277 = vmatpush.msra.mxu0 0.0
  %278 = vmatpush.msra.mxu0 0.0
  %279 = vmatmul.f32.gmra.mxu0 %v258
  %v280 = vpop.f32.mrf.mxu0
  %v281 = vadd.f32 %v82, %v280
  %282 = vmatmul.f32.gmra.mxu0 %v261
  %v283 = vpop.f32.mrf.mxu0
  %v284 = vadd.f32 %v87, %v283
  %285 = vdwg.mxu0
  %v286 = vmul.f32 %v211, %v281
  %v287 = vmul.f32 %v226, %v284
  %v288 = vadd.f32 %v175, %v286
  %v289 = vadd.f32 %v176, %v287
  %v290 = vtanh.pop %v288
  %v291 = vtanh.pop %v289
  %v292 = vsub.f32 1.0, %v241
  %v293 = vsub.f32 1.0, %v256
  %v294 = vmul.f32 %v292, %v290
  %v295 = vmul.f32 %v293, %v291
  %v296 = vmul.f32 %v241, 0.0
  %v297 = vmul.f32 %v256, 0.0
  %v298 = vadd.f32 %v294, %v296
  %v299 = vadd.f32 %v295, %v297
  %s300 = scalar_lea.vmem %s0, 1
  %v301 = vld [vmem:[%s300] sm:$0x1]
  %302 = vmatpush.msra.mxu0 0.0
  %303 = vmatpush.msra.mxu0 0.0
  %304 = vmatpush.msra.mxu0 0.0
  %305 = vmatpush.msra.mxu0 0.0
  %306 = vmatpush.msra.mxu0 0.0
  %307 = vmatpush.msra.mxu0 0.0
  %308 = vmatpush.msra.mxu0 0.0
  %309 = vmatpush.msra.mxu0 0.0
  %310 = vmatpush.msra.mxu0 0.0
  %311 = vmatpush.msra.mxu0 0.0
  %312 = vmatpush.msra.mxu0 0.0
  %313 = vmatpush.msra.mxu0 0.0
  %314 = vmatpush.msra.mxu0 0.0
  %315 = vmatpush.msra.mxu0 0.0
  %316 = vmatpush.msra.mxu0 %v299
  %317 = vmatpush.msra.mxu0 %v298
  %318 = vmatmul.f32.gmra.mxu0 %v92
  %v319 = vpop.f32.mrf.mxu0
  %v320 = vadd.f32 0.0, %v319
  %321 = vmatmul.f32.gmra.mxu0 %v95
  %v322 = vpop.f32.mrf.mxu0
  %v323 = vadd.f32 0.0, %v322
  %324 = vmatmul.f32.gmra.mxu0 %v98
  %v325 = vpop.f32.mrf.mxu0
  %v326 = vadd.f32 0.0, %v325
  %327 = vmatmul.f32.gmra.mxu0 %v101
  %v328 = vpop.f32.mrf.mxu0
  %v329 = vadd.f32 0.0, %v328
  %330 = vdwg.mxu0
  %v332 = vperm.slane %v301, 0
  %v334 = vmul.f32 %v332, %v138
  %v335 = vmul.f32 %v332, %v143
  %v336 = vmul.f32 %v332, %v148
  %v337 = vmul.f32 %v332, %v153
  %v338 = vadd.f32 %v334, %v48
  %v339 = vadd.f32 %v335, %v53
  %v340 = vadd.f32 %v336, %v58
  %v341 = vadd.f32 %v337, %v63
  %v342 = vmul.f32 %v332, %v166
  %v343 = vmul.f32 %v332, %v171
  %v344 = vadd.f32 %v342, %v70
  %v345 = vadd.f32 %v343, %v75
  %v346 = vadd.f32 %v338, %v320
  %v347 = vadd.f32 %v339, %v323
  %v348 = vadd.f32 %v340, %v326
  %v349 = vadd.f32 %v341, %v329
  %v350 = vxor.u32 %v346, 2147483648
  %v351 = vxor.u32 %v347, 2147483648
  %v352 = vxor.u32 %v348, 2147483648
  %v353 = vxor.u32 %v349, 2147483648
  %v354 = vmul.f32 %v350, 1.442695
  %v355 = vpow.pop %v354
  %v356 = vmul.f32 %v351, 1.442695
  %v357 = vpow.pop %v356
  %v358 = vmul.f32 %v352, 1.442695
  %v359 = vpow.pop %v358
  %v360 = vmul.f32 %v353, 1.442695
  %v361 = vpow.pop %v360
  %v362 = vadd.f32 %v355, 1.0
  %v363 = vadd.f32 %v357, 1.0
  %v364 = vadd.f32 %v359, 1.0
  %v365 = vadd.f32 %v361, 1.0
  %v366 = vrcp.pop %v362
  %v367 = vmul.f32 %v362, %v366
  %v368 = vsub.f32 1.0, %v367
  %v369 = vmul.f32 %v366, %v368
  %v370 = vadd.f32 %v366, %v369
  %vm371 = vweird.f32 %v362
  %vm372 = vweird.f32 %v366
  %vm373 = vmor %vm371, %vm372
  %v374 = vsel %vm373, %v366, %v370
  %v375 = vand.u32 2147483647, %v362
  %vm376 = vcmp.eq.f32.partialorder %v375, 8.507059e+37
  %v377 = vand.u32 %v362, 2147483648
  %v378 = vor.u32 1.1754944e-38, %v377
  %v379 = vsel %vm376, %v378, %v374
  %v380 = vmul.f32 1.0, %v379
  %v381 = vrcp.pop %v363
  %v382 = vmul.f32 %v363, %v381
  %v383 = vsub.f32 1.0, %v382
  %v384 = vmul.f32 %v381, %v383
  %v385 = vadd.f32 %v381, %v384
  %vm386 = vweird.f32 %v363
  %vm387 = vweird.f32 %v381
  %vm388 = vmor %vm386, %vm387
  %v389 = vsel %vm388, %v381, %v385
  %v390 = vand.u32 2147483647, %v363
  %vm391 = vcmp.eq.f32.partialorder %v390, 8.507059e+37
  %v392 = vand.u32 %v363, 2147483648
  %v393 = vor.u32 1.1754944e-38, %v392
  %v394 = vsel %vm391, %v393, %v389
  %v395 = vmul.f32 1.0, %v394
  %v396 = vrcp.pop %v364
  %v397 = vmul.f32 %v364, %v396
  %v398 = vsub.f32 1.0, %v397
  %v399 = vmul.f32 %v396, %v398
  %v400 = vadd.f32 %v396, %v399
  %vm401 = vweird.f32 %v364
  %vm402 = vweird.f32 %v396
  %vm403 = vmor %vm401, %vm402
  %v404 = vsel %vm403, %v396, %v400
  %v405 = vand.u32 2147483647, %v364
  %vm406 = vcmp.eq.f32.partialorder %v405, 8.507059e+37
  %v407 = vand.u32 %v364, 2147483648
  %v408 = vor.u32 1.1754944e-38, %v407
  %v409 = vsel %vm406, %v408, %v404
  %v410 = vmul.f32 1.0, %v409
  %v411 = vrcp.pop %v365
  %v412 = vmul.f32 %v365, %v411
  %v413 = vsub.f32 1.0, %v412
  %v414 = vmul.f32 %v411, %v413
  %v415 = vadd.f32 %v411, %v414
  %vm416 = vweird.f32 %v365
  %vm417 = vweird.f32 %v411
  %vm418 = vmor %vm416, %vm417
  %v419 = vsel %vm418, %v411, %v415
  %v420 = vand.u32 2147483647, %v365
  %vm421 = vcmp.eq.f32.partialorder %v420, 8.507059e+37
  %v422 = vand.u32 %v365, 2147483648
  %v423 = vor.u32 1.1754944e-38, %v422
  %v424 = vsel %vm421, %v423, %v419
  %v425 = vmul.f32 1.0, %v424
  %426 = vmatpush.msra.mxu0 0.0
  %427 = vmatpush.msra.mxu0 0.0
  %428 = vmatpush.msra.mxu0 0.0
  %429 = vmatpush.msra.mxu0 0.0
  %430 = vmatpush.msra.mxu0 0.0
  %431 = vmatpush.msra.mxu0 0.0
  %432 = vmatpush.msra.mxu0 0.0
  %433 = vmatpush.msra.mxu0 0.0
  %434 = vmatpush.msra.mxu0 0.0
  %435 = vmatpush.msra.mxu0 0.0
  %436 = vmatpush.msra.mxu0 0.0
  %437 = vmatpush.msra.mxu0 0.0
  %438 = vmatpush.msra.mxu0 0.0
  %439 = vmatpush.msra.mxu0 0.0
  %440 = vmatpush.msra.mxu0 %v299
  %441 = vmatpush.msra.mxu0 %v298
  %442 = vmatmul.f32.gmra.mxu0 %v258
  %v443 = vpop.f32.mrf.mxu0
  %v444 = vadd.f32 %v82, %v443
  %445 = vmatmul.f32.gmra.mxu0 %v261
  %v446 = vpop.f32.mrf.mxu0
  %v447 = vadd.f32 %v87, %v446
  %448 = vdwg.mxu0
  %v449 = vmul.f32 %v380, %v444
  %v450 = vmul.f32 %v395, %v447
  %v451 = vadd.f32 %v344, %v449
  %v452 = vadd.f32 %v345, %v450
  %v453 = vtanh.pop %v451
  %v454 = vtanh.pop %v452
  %v455 = vsub.f32 1.0, %v410
  %v456 = vsub.f32 1.0, %v425
  %v457 = vmul.f32 %v455, %v453
  %v458 = vmul.f32 %v456, %v454
  %v459 = vmul.f32 %v410, %v298
  %v460 = vmul.f32 %v425, %v299
  %v461 = vadd.f32 %v457, %v459
  %v462 = vadd.f32 %v458, %v460
  %s463 = scalar_lea.vmem %s0, 2
  %v464 = vld [vmem:[%s463] sm:$0x1]
  %465 = vmatpush.msra.mxu0 0.0
  %466 = vmatpush.msra.mxu0 0.0
  %467 = vmatpush.msra.mxu0 0.0
  %468 = vmatpush.msra.mxu0 0.0
  %469 = vmatpush.msra.mxu0 0.0
  %470 = vmatpush.msra.mxu0 0.0
  %471 = vmatpush.msra.mxu0 0.0
  %472 = vmatpush.msra.mxu0 0.0
  %473 = vmatpush.msra.mxu0 0.0
  %474 = vmatpush.msra.mxu0 0.0
  %475 = vmatpush.msra.mxu0 0.0
  %476 = vmatpush.msra.mxu0 0.0
  %477 = vmatpush.msra.mxu0 0.0
  %478 = vmatpush.msra.mxu0 0.0
  %479 = vmatpush.msra.mxu0 %v462
  %480 = vmatpush.msra.mxu0 %v461
  %481 = vmatmul.f32.gmra.mxu0 %v92
  %v482 = vpop.f32.mrf.mxu0
  %v483 = vadd.f32 0.0, %v482
  %484 = vmatmul.f32.gmra.mxu0 %v95
  %v485 = vpop.f32.mrf.mxu0
  %v486 = vadd.f32 0.0, %v485
  %487 = vmatmul.f32.gmra.mxu0 %v98
  %v488 = vpop.f32.mrf.mxu0
  %v489 = vadd.f32 0.0, %v488
  %490 = vmatmul.f32.gmra.mxu0 %v101
  %v491 = vpop.f32.mrf.mxu0
  %v492 = vadd.f32 0.0, %v491
  %493 = vdwg.mxu0
  %v495 = vperm.slane %v464, 0
  %v497 = vmul.f32 %v495, %v138
  %v498 = vmul.f32 %v495, %v143
  %v499 = vmul.f32 %v495, %v148
  %v500 = vmul.f32 %v495, %v153
  %v501 = vadd.f32 %v497, %v48
  %v502 = vadd.f32 %v498, %v53
  %v503 = vadd.f32 %v499, %v58
  %v504 = vadd.f32 %v500, %v63
  %v505 = vmul.f32 %v495, %v166
  %v506 = vmul.f32 %v495, %v171
  %v507 = vadd.f32 %v505, %v70
  %v508 = vadd.f32 %v506, %v75
  %v509 = vadd.f32 %v501, %v483
  %v510 = vadd.f32 %v502, %v486
  %v511 = vadd.f32 %v503, %v489
  %v512 = vadd.f32 %v504, %v492
  %v513 = vxor.u32 %v509, 2147483648
  %v514 = vxor.u32 %v510, 2147483648
  %v515 = vxor.u32 %v511, 2147483648
  %v516 = vxor.u32 %v512, 2147483648
  %v517 = vmul.f32 %v513, 1.442695
  %v518 = vpow.pop %v517
  %v519 = vmul.f32 %v514, 1.442695
  %v520 = vpow.pop %v519
  %v521 = vmul.f32 %v515, 1.442695
  %v522 = vpow.pop %v521
  %v523 = vmul.f32 %v516, 1.442695
  %v524 = vpow.pop %v523
  %v525 = vadd.f32 %v518, 1.0
  %v526 = vadd.f32 %v520, 1.0
  %v527 = vadd.f32 %v522, 1.0
  %v528 = vadd.f32 %v524, 1.0
  %v529 = vrcp.pop %v525
  %v530 = vmul.f32 %v525, %v529
  %v531 = vsub.f32 1.0, %v530
  %v532 = vmul.f32 %v529, %v531
  %v533 = vadd.f32 %v529, %v532
  %vm534 = vweird.f32 %v525
  %vm535 = vweird.f32 %v529
  %vm536 = vmor %vm534, %vm535
  %v537 = vsel %vm536, %v529, %v533
  %v538 = vand.u32 2147483647, %v525
  %vm539 = vcmp.eq.f32.partialorder %v538, 8.507059e+37
  %v540 = vand.u32 %v525, 2147483648
  %v541 = vor.u32 1.1754944e-38, %v540
  %v542 = vsel %vm539, %v541, %v537
  %v543 = vmul.f32 1.0, %v542
  %v544 = vrcp.pop %v526
  %v545 = vmul.f32 %v526, %v544
  %v546 = vsub.f32 1.0, %v545
  %v547 = vmul.f32 %v544, %v546
  %v548 = vadd.f32 %v544, %v547
  %vm549 = vweird.f32 %v526
  %vm550 = vweird.f32 %v544
  %vm551 = vmor %vm549, %vm550
  %v552 = vsel %vm551, %v544, %v548
  %v553 = vand.u32 2147483647, %v526
  %vm554 = vcmp.eq.f32.partialorder %v553, 8.507059e+37
  %v555 = vand.u32 %v526, 2147483648
  %v556 = vor.u32 1.1754944e-38, %v555
  %v557 = vsel %vm554, %v556, %v552
  %v558 = vmul.f32 1.0, %v557
  %v559 = vrcp.pop %v527
  %v560 = vmul.f32 %v527, %v559
  %v561 = vsub.f32 1.0, %v560
  %v562 = vmul.f32 %v559, %v561
  %v563 = vadd.f32 %v559, %v562
  %vm564 = vweird.f32 %v527
  %vm565 = vweird.f32 %v559
  %vm566 = vmor %vm564, %vm565
  %v567 = vsel %vm566, %v559, %v563
  %v568 = vand.u32 2147483647, %v527
  %vm569 = vcmp.eq.f32.partialorder %v568, 8.507059e+37
  %v570 = vand.u32 %v527, 2147483648
  %v571 = vor.u32 1.1754944e-38, %v570
  %v572 = vsel %vm569, %v571, %v567
  %v573 = vmul.f32 1.0, %v572
  %v574 = vrcp.pop %v528
  %v575 = vmul.f32 %v528, %v574
  %v576 = vsub.f32 1.0, %v575
  %v577 = vmul.f32 %v574, %v576
  %v578 = vadd.f32 %v574, %v577
  %vm579 = vweird.f32 %v528
  %vm580 = vweird.f32 %v574
  %vm581 = vmor %vm579, %vm580
  %v582 = vsel %vm581, %v574, %v578
  %v583 = vand.u32 2147483647, %v528
  %vm584 = vcmp.eq.f32.partialorder %v583, 8.507059e+37
  %v585 = vand.u32 %v528, 2147483648
  %v586 = vor.u32 1.1754944e-38, %v585
  %v587 = vsel %vm584, %v586, %v582
  %v588 = vmul.f32 1.0, %v587
  %589 = vmatpush.msra.mxu0 0.0
  %590 = vmatpush.msra.mxu0 0.0
  %591 = vmatpush.msra.mxu0 0.0
  %592 = vmatpush.msra.mxu0 0.0
  %593 = vmatpush.msra.mxu0 0.0
  %594 = vmatpush.msra.mxu0 0.0
  %595 = vmatpush.msra.mxu0 0.0
  %596 = vmatpush.msra.mxu0 0.0
  %597 = vmatpush.msra.mxu0 0.0
  %598 = vmatpush.msra.mxu0 0.0
  %599 = vmatpush.msra.mxu0 0.0
  %600 = vmatpush.msra.mxu0 0.0
  %601 = vmatpush.msra.mxu0 0.0
  %602 = vmatpush.msra.mxu0 0.0
  %603 = vmatpush.msra.mxu0 %v462
  %604 = vmatpush.msra.mxu0 %v461
  %605 = vmatmul.f32.gmra.mxu0 %v258
  %v606 = vpop.f32.mrf.mxu0
  %v607 = vadd.f32 %v82, %v606
  %608 = vmatmul.f32.gmra.mxu0 %v261
  %v609 = vpop.f32.mrf.mxu0
  %v610 = vadd.f32 %v87, %v609
  %611 = vdwg.mxu0
  %v612 = vmul.f32 %v543, %v607
  %v613 = vmul.f32 %v558, %v610
  %v614 = vadd.f32 %v507, %v612
  %v615 = vadd.f32 %v508, %v613
  %v616 = vtanh.pop %v614
  %v617 = vtanh.pop %v615
  %v618 = vsub.f32 1.0, %v573
  %v619 = vsub.f32 1.0, %v588
  %v620 = vmul.f32 %v618, %v616
  %v621 = vmul.f32 %v619, %v617
  %v622 = vmul.f32 %v573, %v461
  %v623 = vmul.f32 %v588, %v462
  %v624 = vadd.f32 %v620, %v622
  %v625 = vadd.f32 %v621, %v623
  %s626 = scalar_lea.vmem %s0, 3
  %v627 = vld [vmem:[%s626] sm:$0x1]
  %628 = vmatpush.msra.mxu0 0.0
  %629 = vmatpush.msra.mxu0 0.0
  %630 = vmatpush.msra.mxu0 0.0
  %631 = vmatpush.msra.mxu0 0.0
  %632 = vmatpush.msra.mxu0 0.0
  %633 = vmatpush.msra.mxu0 0.0
  %634 = vmatpush.msra.mxu0 0.0
  %635 = vmatpush.msra.mxu0 0.0
  %636 = vmatpush.msra.mxu0 0.0
  %637 = vmatpush.msra.mxu0 0.0
  %638 = vmatpush.msra.mxu0 0.0
  %639 = vmatpush.msra.mxu0 0.0
  %640 = vmatpush.msra.mxu0 0.0
  %641 = vmatpush.msra.mxu0 0.0
  %642 = vmatpush.msra.mxu0 %v625
  %643 = vmatpush.msra.mxu0 %v624
  %644 = vmatmul.f32.gmra.mxu0 %v92
  %v645 = vpop.f32.mrf.mxu0
  %v646 = vadd.f32 0.0, %v645
  %647 = vmatmul.f32.gmra.mxu0 %v95
  %v648 = vpop.f32.mrf.mxu0
  %v649 = vadd.f32 0.0, %v648
  %650 = vmatmul.f32.gmra.mxu0 %v98
  %v651 = vpop.f32.mrf.mxu0
  %v652 = vadd.f32 0.0, %v651
  %653 = vmatmul.f32.gmra.mxu0 %v101
  %v654 = vpop.f32.mrf.mxu0
  %v655 = vadd.f32 0.0, %v654
  %656 = vdwg.mxu0
  %v658 = vperm.slane %v627, 0
  %v660 = vmul.f32 %v658, %v138
  %v661 = vmul.f32 %v658, %v143
  %v662 = vmul.f32 %v658, %v148
  %v663 = vmul.f32 %v658, %v153
  %v664 = vadd.f32 %v660, %v48
  %v665 = vadd.f32 %v661, %v53
  %v666 = vadd.f32 %v662, %v58
  %v667 = vadd.f32 %v663, %v63
  %v668 = vmul.f32 %v658, %v166
  %v669 = vmul.f32 %v658, %v171
  %v670 = vadd.f32 %v668, %v70
  %v671 = vadd.f32 %v669, %v75
  %v672 = vadd.f32 %v664, %v646
  %v673 = vadd.f32 %v665, %v649
  %v674 = vadd.f32 %v666, %v652
  %v675 = vadd.f32 %v667, %v655
  %v676 = vxor.u32 %v672, 2147483648
  %v677 = vxor.u32 %v673, 2147483648
  %v678 = vxor.u32 %v674, 2147483648
  %v679 = vxor.u32 %v675, 2147483648
  %v680 = vmul.f32 %v676, 1.442695
  %v681 = vpow.pop %v680
  %v682 = vmul.f32 %v677, 1.442695
  %v683 = vpow.pop %v682
  %v684 = vmul.f32 %v678, 1.442695
  %v685 = vpow.pop %v684
  %v686 = vmul.f32 %v679, 1.442695
  %v687 = vpow.pop %v686
  %v688 = vadd.f32 %v681, 1.0
  %v689 = vadd.f32 %v683, 1.0
  %v690 = vadd.f32 %v685, 1.0
  %v691 = vadd.f32 %v687, 1.0
  %v692 = vrcp.pop %v688
  %v693 = vmul.f32 %v688, %v692
  %v694 = vsub.f32 1.0, %v693
  %v695 = vmul.f32 %v692, %v694
  %v696 = vadd.f32 %v692, %v695
  %vm697 = vweird.f32 %v688
  %vm698 = vweird.f32 %v692
  %vm699 = vmor %vm697, %vm698
  %v700 = vsel %vm699, %v692, %v696
  %v701 = vand.u32 2147483647, %v688
  %vm702 = vcmp.eq.f32.partialorder %v701, 8.507059e+37
  %v703 = vand.u32 %v688, 2147483648
  %v704 = vor.u32 1.1754944e-38, %v703
  %v705 = vsel %vm702, %v704, %v700
  %v706 = vmul.f32 1.0, %v705
  %v707 = vrcp.pop %v689
  %v708 = vmul.f32 %v689, %v707
  %v709 = vsub.f32 1.0, %v708
  %v710 = vmul.f32 %v707, %v709
  %v711 = vadd.f32 %v707, %v710
  %vm712 = vweird.f32 %v689
  %vm713 = vweird.f32 %v707
  %vm714 = vmor %vm712, %vm713
  %v715 = vsel %vm714, %v707, %v711
  %v716 = vand.u32 2147483647, %v689
  %vm717 = vcmp.eq.f32.partialorder %v716, 8.507059e+37
  %v718 = vand.u32 %v689, 2147483648
  %v719 = vor.u32 1.1754944e-38, %v718
  %v720 = vsel %vm717, %v719, %v715
  %v721 = vmul.f32 1.0, %v720
  %v722 = vrcp.pop %v690
  %v723 = vmul.f32 %v690, %v722
  %v724 = vsub.f32 1.0, %v723
  %v725 = vmul.f32 %v722, %v724
  %v726 = vadd.f32 %v722, %v725
  %vm727 = vweird.f32 %v690
  %vm728 = vweird.f32 %v722
  %vm729 = vmor %vm727, %vm728
  %v730 = vsel %vm729, %v722, %v726
  %v731 = vand.u32 2147483647, %v690
  %vm732 = vcmp.eq.f32.partialorder %v731, 8.507059e+37
  %v733 = vand.u32 %v690, 2147483648
  %v734 = vor.u32 1.1754944e-38, %v733
  %v735 = vsel %vm732, %v734, %v730
  %v736 = vmul.f32 1.0, %v735
  %v737 = vrcp.pop %v691
  %v738 = vmul.f32 %v691, %v737
  %v739 = vsub.f32 1.0, %v738
  %v740 = vmul.f32 %v737, %v739
  %v741 = vadd.f32 %v737, %v740
  %vm742 = vweird.f32 %v691
  %vm743 = vweird.f32 %v737
  %vm744 = vmor %vm742, %vm743
  %v745 = vsel %vm744, %v737, %v741
  %v746 = vand.u32 2147483647, %v691
  %vm747 = vcmp.eq.f32.partialorder %v746, 8.507059e+37
  %v748 = vand.u32 %v691, 2147483648
  %v749 = vor.u32 1.1754944e-38, %v748
  %v750 = vsel %vm747, %v749, %v745
  %v751 = vmul.f32 1.0, %v750
  %752 = vmatpush.msra.mxu0 0.0
  %753 = vmatpush.msra.mxu0 0.0
  %754 = vmatpush.msra.mxu0 0.0
  %755 = vmatpush.msra.mxu0 0.0
  %756 = vmatpush.msra.mxu0 0.0
  %757 = vmatpush.msra.mxu0 0.0
  %758 = vmatpush.msra.mxu0 0.0
  %759 = vmatpush.msra.mxu0 0.0
  %760 = vmatpush.msra.mxu0 0.0
  %761 = vmatpush.msra.mxu0 0.0
  %762 = vmatpush.msra.mxu0 0.0
  %763 = vmatpush.msra.mxu0 0.0
  %764 = vmatpush.msra.mxu0 0.0
  %765 = vmatpush.msra.mxu0 0.0
  %766 = vmatpush.msra.mxu0 %v625
  %767 = vmatpush.msra.mxu0 %v624
  %768 = vmatmul.f32.gmra.mxu0 %v258
  %v769 = vpop.f32.mrf.mxu0
  %v770 = vadd.f32 %v82, %v769
  %771 = vmatmul.f32.gmra.mxu0 %v261
  %v772 = vpop.f32.mrf.mxu0
  %v773 = vadd.f32 %v87, %v772
  %774 = vdwg.mxu0
  %v775 = vmul.f32 %v706, %v770
  %v776 = vmul.f32 %v721, %v773
  %v777 = vadd.f32 %v670, %v775
  %v778 = vadd.f32 %v671, %v776
  %v779 = vtanh.pop %v777
  %v780 = vtanh.pop %v778
  %v781 = vsub.f32 1.0, %v736
  %v782 = vsub.f32 1.0, %v751
  %v783 = vmul.f32 %v781, %v779
  %v784 = vmul.f32 %v782, %v780
  %v785 = vmul.f32 %v736, %v624
  %v786 = vmul.f32 %v751, %v625
  %v787 = vadd.f32 %v783, %v785
  %v788 = vadd.f32 %v784, %v786
  %s789 = scalar_lea.vmem %s0, 4
  %v790 = vld [vmem:[%s789] sm:$0x1]
  %791 = vmatpush.msra.mxu0 0.0
  %792 = vmatpush.msra.mxu0 0.0
  %793 = vmatpush.msra.mxu0 0.0
  %794 = vmatpush.msra.mxu0 0.0
  %795 = vmatpush.msra.mxu0 0.0
  %796 = vmatpush.msra.mxu0 0.0
  %797 = vmatpush.msra.mxu0 0.0
  %798 = vmatpush.msra.mxu0 0.0
  %799 = vmatpush.msra.mxu0 0.0
  %800 = vmatpush.msra.mxu0 0.0
  %801 = vmatpush.msra.mxu0 0.0
  %802 = vmatpush.msra.mxu0 0.0
  %803 = vmatpush.msra.mxu0 0.0
  %804 = vmatpush.msra.mxu0 0.0
  %805 = vmatpush.msra.mxu0 %v788
  %806 = vmatpush.msra.mxu0 %v787
  %807 = vmatmul.f32.gmra.mxu0 %v92
  %v808 = vpop.f32.mrf.mxu0
  %v809 = vadd.f32 0.0, %v808
  %810 = vmatmul.f32.gmra.mxu0 %v95
  %v811 = vpop.f32.mrf.mxu0
  %v812 = vadd.f32 0.0, %v811
  %813 = vmatmul.f32.gmra.mxu0 %v98
  %v814 = vpop.f32.mrf.mxu0
  %v815 = vadd.f32 0.0, %v814
  %816 = vmatmul.f32.gmra.mxu0 %v101
  %v817 = vpop.f32.mrf.mxu0
  %v818 = vadd.f32 0.0, %v817
  %819 = vdwg.mxu0
  %v821 = vperm.slane %v790, 0
  %v823 = vmul.f32 %v821, %v138
  %v824 = vmul.f32 %v821, %v143
  %v825 = vmul.f32 %v821, %v148
  %v826 = vmul.f32 %v821, %v153
  %v827 = vadd.f32 %v823, %v48
  %v828 = vadd.f32 %v824, %v53
  %v829 = vadd.f32 %v825, %v58
  %v830 = vadd.f32 %v826, %v63
  %v831 = vmul.f32 %v821, %v166
  %v832 = vmul.f32 %v821, %v171
  %v833 = vadd.f32 %v831, %v70
  %v834 = vadd.f32 %v832, %v75
  %v835 = vadd.f32 %v827, %v809
  %v836 = vadd.f32 %v828, %v812
  %v837 = vadd.f32 %v829, %v815
  %v838 = vadd.f32 %v830, %v818
  %v839 = vxor.u32 %v835, 2147483648
  %v840 = vxor.u32 %v836, 2147483648
  %v841 = vxor.u32 %v837, 2147483648
  %v842 = vxor.u32 %v838, 2147483648
  %v843 = vmul.f32 %v839, 1.442695
  %v844 = vpow.pop %v843
  %v845 = vmul.f32 %v840, 1.442695
  %v846 = vpow.pop %v845
  %v847 = vmul.f32 %v841, 1.442695
  %v848 = vpow.pop %v847
  %v849 = vmul.f32 %v842, 1.442695
  %v850 = vpow.pop %v849
  %v851 = vadd.f32 %v844, 1.0
  %v852 = vadd.f32 %v846, 1.0
  %v853 = vadd.f32 %v848, 1.0
  %v854 = vadd.f32 %v850, 1.0
  %v855 = vrcp.pop %v851
  %v856 = vmul.f32 %v851, %v855
  %v857 = vsub.f32 1.0, %v856
  %v858 = vmul.f32 %v855, %v857
  %v859 = vadd.f32 %v855, %v858
  %vm860 = vweird.f32 %v851
  %vm861 = vweird.f32 %v855
  %vm862 = vmor %vm860, %vm861
  %v863 = vsel %vm862, %v855, %v859
  %v864 = vand.u32 2147483647, %v851
  %vm865 = vcmp.eq.f32.partialorder %v864, 8.507059e+37
  %v866 = vand.u32 %v851, 2147483648
  %v867 = vor.u32 1.1754944e-38, %v866
  %v868 = vsel %vm865, %v867, %v863
  %v869 = vmul.f32 1.0, %v868
  %v870 = vrcp.pop %v852
  %v871 = vmul.f32 %v852, %v870
  %v872 = vsub.f32 1.0, %v871
  %v873 = vmul.f32 %v870, %v872
  %v874 = vadd.f32 %v870, %v873
  %vm875 = vweird.f32 %v852
  %vm876 = vweird.f32 %v870
  %vm877 = vmor %vm875, %vm876
  %v878 = vsel %vm877, %v870, %v874
  %v879 = vand.u32 2147483647, %v852
  %vm880 = vcmp.eq.f32.partialorder %v879, 8.507059e+37
  %v881 = vand.u32 %v852, 2147483648
  %v882 = vor.u32 1.1754944e-38, %v881
  %v883 = vsel %vm880, %v882, %v878
  %v884 = vmul.f32 1.0, %v883
  %v885 = vrcp.pop %v853
  %v886 = vmul.f32 %v853, %v885
  %v887 = vsub.f32 1.0, %v886
  %v888 = vmul.f32 %v885, %v887
  %v889 = vadd.f32 %v885, %v888
  %vm890 = vweird.f32 %v853
  %vm891 = vweird.f32 %v885
  %vm892 = vmor %vm890, %vm891
  %v893 = vsel %vm892, %v885, %v889
  %v894 = vand.u32 2147483647, %v853
  %vm895 = vcmp.eq.f32.partialorder %v894, 8.507059e+37
  %v896 = vand.u32 %v853, 2147483648
  %v897 = vor.u32 1.1754944e-38, %v896
  %v898 = vsel %vm895, %v897, %v893
  %v899 = vmul.f32 1.0, %v898
  %v900 = vrcp.pop %v854
  %v901 = vmul.f32 %v854, %v900
  %v902 = vsub.f32 1.0, %v901
  %v903 = vmul.f32 %v900, %v902
  %v904 = vadd.f32 %v900, %v903
  %vm905 = vweird.f32 %v854
  %vm906 = vweird.f32 %v900
  %vm907 = vmor %vm905, %vm906
  %v908 = vsel %vm907, %v900, %v904
  %v909 = vand.u32 2147483647, %v854
  %vm910 = vcmp.eq.f32.partialorder %v909, 8.507059e+37
  %v911 = vand.u32 %v854, 2147483648
  %v912 = vor.u32 1.1754944e-38, %v911
  %v913 = vsel %vm910, %v912, %v908
  %v914 = vmul.f32 1.0, %v913
  %915 = vmatpush.msra.mxu0 0.0
  %916 = vmatpush.msra.mxu0 0.0
  %917 = vmatpush.msra.mxu0 0.0
  %918 = vmatpush.msra.mxu0 0.0
  %919 = vmatpush.msra.mxu0 0.0
  %920 = vmatpush.msra.mxu0 0.0
  %921 = vmatpush.msra.mxu0 0.0
  %922 = vmatpush.msra.mxu0 0.0
  %923 = vmatpush.msra.mxu0 0.0
  %924 = vmatpush.msra.mxu0 0.0
  %925 = vmatpush.msra.mxu0 0.0
  %926 = vmatpush.msra.mxu0 0.0
  %927 = vmatpush.msra.mxu0 0.0
  %928 = vmatpush.msra.mxu0 0.0
  %929 = vmatpush.msra.mxu0 %v788
  %930 = vmatpush.msra.mxu0 %v787
  %931 = vmatmul.f32.gmra.mxu0 %v258
  %v932 = vpop.f32.mrf.mxu0
  %v933 = vadd.f32 %v82, %v932
  %934 = vmatmul.f32.gmra.mxu0 %v261
  %v935 = vpop.f32.mrf.mxu0
  %v936 = vadd.f32 %v87, %v935
  %937 = vdwg.mxu0
  %v938 = vmul.f32 %v869, %v933
  %v939 = vmul.f32 %v884, %v936
  %v940 = vadd.f32 %v833, %v938
  %v941 = vadd.f32 %v834, %v939
  %v942 = vtanh.pop %v940
  %v943 = vtanh.pop %v941
  %v944 = vsub.f32 1.0, %v899
  %v945 = vsub.f32 1.0, %v914
  %v946 = vmul.f32 %v944, %v942
  %v947 = vmul.f32 %v945, %v943
  %v948 = vmul.f32 %v899, %v787
  %v949 = vmul.f32 %v914, %v788
  %v950 = vadd.f32 %v946, %v948
  %v951 = vadd.f32 %v947, %v949
  %s952 = scalar_lea.vmem %s0, 5
  %v953 = vld [vmem:[%s952] sm:$0x1]
  %954 = vmatpush.msra.mxu0 0.0
  %955 = vmatpush.msra.mxu0 0.0
  %956 = vmatpush.msra.mxu0 0.0
  %957 = vmatpush.msra.mxu0 0.0
  %958 = vmatpush.msra.mxu0 0.0
  %959 = vmatpush.msra.mxu0 0.0
  %960 = vmatpush.msra.mxu0 0.0
  %961 = vmatpush.msra.mxu0 0.0
  %962 = vmatpush.msra.mxu0 0.0
  %963 = vmatpush.msra.mxu0 0.0
  %964 = vmatpush.msra.mxu0 0.0
  %965 = vmatpush.msra.mxu0 0.0
  %966 = vmatpush.msra.mxu0 0.0
  %967 = vmatpush.msra.mxu0 0.0
  %968 = vmatpush.msra.mxu0 %v951
  %969 = vmatpush.msra.mxu0 %v950
  %970 = vmatmul.f32.gmra.mxu0 %v92
  %v971 = vpop.f32.mrf.mxu0
  %v972 = vadd.f32 0.0, %v971
  %973 = vmatmul.f32.gmra.mxu0 %v95
  %v974 = vpop.f32.mrf.mxu0
  %v975 = vadd.f32 0.0, %v974
  %976 = vmatmul.f32.gmra.mxu0 %v98
  %v977 = vpop.f32.mrf.mxu0
  %v978 = vadd.f32 0.0, %v977
  %979 = vmatmul.f32.gmra.mxu0 %v101
  %v980 = vpop.f32.mrf.mxu0
  %v981 = vadd.f32 0.0, %v980
  %982 = vdwg.mxu0
  %v984 = vperm.slane %v953, 0
  %v986 = vmul.f32 %v984, %v138
  %v987 = vmul.f32 %v984, %v143
  %v988 = vmul.f32 %v984, %v148
  %v989 = vmul.f32 %v984, %v153
  %v990 = vadd.f32 %v986, %v48
  %v991 = vadd.f32 %v987, %v53
  %v992 = vadd.f32 %v988, %v58
  %v993 = vadd.f32 %v989, %v63
  %v994 = vmul.f32 %v984, %v166
  %v995 = vmul.f32 %v984, %v171
  %v996 = vadd.f32 %v994, %v70
  %v997 = vadd.f32 %v995, %v75
  %v998 = vadd.f32 %v990, %v972
  %v999 = vadd.f32 %v991, %v975
  %v1000 = vadd.f32 %v992, %v978
  %v1001 = vadd.f32 %v993, %v981
  %v1002 = vxor.u32 %v998, 2147483648
  %v1003 = vxor.u32 %v999, 2147483648
  %v1004 = vxor.u32 %v1000, 2147483648
  %v1005 = vxor.u32 %v1001, 2147483648
  %v1006 = vmul.f32 %v1002, 1.442695
  %v1007 = vpow.pop %v1006
  %v1008 = vmul.f32 %v1003, 1.442695
  %v1009 = vpow.pop %v1008
  %v1010 = vmul.f32 %v1004, 1.442695
  %v1011 = vpow.pop %v1010
  %v1012 = vmul.f32 %v1005, 1.442695
  %v1013 = vpow.pop %v1012
  %v1014 = vadd.f32 %v1007, 1.0
  %v1015 = vadd.f32 %v1009, 1.0
  %v1016 = vadd.f32 %v1011, 1.0
  %v1017 = vadd.f32 %v1013, 1.0
  %v1018 = vrcp.pop %v1014
  %v1019 = vmul.f32 %v1014, %v1018
  %v1020 = vsub.f32 1.0, %v1019
  %v1021 = vmul.f32 %v1018, %v1020
  %v1022 = vadd.f32 %v1018, %v1021
  %vm1023 = vweird.f32 %v1014
  %vm1024 = vweird.f32 %v1018
  %vm1025 = vmor %vm1023, %vm1024
  %v1026 = vsel %vm1025, %v1018, %v1022
  %v1027 = vand.u32 2147483647, %v1014
  %vm1028 = vcmp.eq.f32.partialorder %v1027, 8.507059e+37
  %v1029 = vand.u32 %v1014, 2147483648
  %v1030 = vor.u32 1.1754944e-38, %v1029
  %v1031 = vsel %vm1028, %v1030, %v1026
  %v1032 = vmul.f32 1.0, %v1031
  %v1033 = vrcp.pop %v1015
  %v1034 = vmul.f32 %v1015, %v1033
  %v1035 = vsub.f32 1.0, %v1034
  %v1036 = vmul.f32 %v1033, %v1035
  %v1037 = vadd.f32 %v1033, %v1036
  %vm1038 = vweird.f32 %v1015
  %vm1039 = vweird.f32 %v1033
  %vm1040 = vmor %vm1038, %vm1039
  %v1041 = vsel %vm1040, %v1033, %v1037
  %v1042 = vand.u32 2147483647, %v1015
  %vm1043 = vcmp.eq.f32.partialorder %v1042, 8.507059e+37
  %v1044 = vand.u32 %v1015, 2147483648
  %v1045 = vor.u32 1.1754944e-38, %v1044
  %v1046 = vsel %vm1043, %v1045, %v1041
  %v1047 = vmul.f32 1.0, %v1046
  %v1048 = vrcp.pop %v1016
  %v1049 = vmul.f32 %v1016, %v1048
  %v1050 = vsub.f32 1.0, %v1049
  %v1051 = vmul.f32 %v1048, %v1050
  %v1052 = vadd.f32 %v1048, %v1051
  %vm1053 = vweird.f32 %v1016
  %vm1054 = vweird.f32 %v1048
  %vm1055 = vmor %vm1053, %vm1054
  %v1056 = vsel %vm1055, %v1048, %v1052
  %v1057 = vand.u32 2147483647, %v1016
  %vm1058 = vcmp.eq.f32.partialorder %v1057, 8.507059e+37
  %v1059 = vand.u32 %v1016, 2147483648
  %v1060 = vor.u32 1.1754944e-38, %v1059
  %v1061 = vsel %vm1058, %v1060, %v1056
  %v1062 = vmul.f32 1.0, %v1061
  %v1063 = vrcp.pop %v1017
  %v1064 = vmul.f32 %v1017, %v1063
  %v1065 = vsub.f32 1.0, %v1064
  %v1066 = vmul.f32 %v1063, %v1065
  %v1067 = vadd.f32 %v1063, %v1066
  %vm1068 = vweird.f32 %v1017
  %vm1069 = vweird.f32 %v1063
  %vm1070 = vmor %vm1068, %vm1069
  %v1071 = vsel %vm1070, %v1063, %v1067
  %v1072 = vand.u32 2147483647, %v1017
  %vm1073 = vcmp.eq.f32.partialorder %v1072, 8.507059e+37
  %v1074 = vand.u32 %v1017, 2147483648
  %v1075 = vor.u32 1.1754944e-38, %v1074
  %v1076 = vsel %vm1073, %v1075, %v1071
  %v1077 = vmul.f32 1.0, %v1076
  %1078 = vmatpush.msra.mxu0 0.0
  %1079 = vmatpush.msra.mxu0 0.0
  %1080 = vmatpush.msra.mxu0 0.0
  %1081 = vmatpush.msra.mxu0 0.0
  %1082 = vmatpush.msra.mxu0 0.0
  %1083 = vmatpush.msra.mxu0 0.0
  %1084 = vmatpush.msra.mxu0 0.0
  %1085 = vmatpush.msra.mxu0 0.0
  %1086 = vmatpush.msra.mxu0 0.0
  %1087 = vmatpush.msra.mxu0 0.0
  %1088 = vmatpush.msra.mxu0 0.0
  %1089 = vmatpush.msra.mxu0 0.0
  %1090 = vmatpush.msra.mxu0 0.0
  %1091 = vmatpush.msra.mxu0 0.0
  %1092 = vmatpush.msra.mxu0 %v951
  %1093 = vmatpush.msra.mxu0 %v950
  %1094 = vmatmul.f32.gmra.mxu0 %v258
  %v1095 = vpop.f32.mrf.mxu0
  %v1096 = vadd.f32 %v82, %v1095
  %1097 = vmatmul.f32.gmra.mxu0 %v261
  %v1098 = vpop.f32.mrf.mxu0
  %v1099 = vadd.f32 %v87, %v1098
  %1100 = vdwg.mxu0
  %v1101 = vmul.f32 %v1032, %v1096
  %v1102 = vmul.f32 %v1047, %v1099
  %v1103 = vadd.f32 %v996, %v1101
  %v1104 = vadd.f32 %v997, %v1102
  %v1105 = vtanh.pop %v1103
  %v1106 = vtanh.pop %v1104
  %v1107 = vsub.f32 1.0, %v1062
  %v1108 = vsub.f32 1.0, %v1077
  %v1109 = vmul.f32 %v1107, %v1105
  %v1110 = vmul.f32 %v1108, %v1106
  %v1111 = vmul.f32 %v1062, %v950
  %v1112 = vmul.f32 %v1077, %v951
  %v1113 = vadd.f32 %v1109, %v1111
  %v1114 = vadd.f32 %v1110, %v1112
  %s1115 = scalar_lea.vmem %s0, 6
  %v1116 = vld [vmem:[%s1115] sm:$0x1]
  %1117 = vmatpush.msra.mxu0 0.0
  %1118 = vmatpush.msra.mxu0 0.0
  %1119 = vmatpush.msra.mxu0 0.0
  %1120 = vmatpush.msra.mxu0 0.0
  %1121 = vmatpush.msra.mxu0 0.0
  %1122 = vmatpush.msra.mxu0 0.0
  %1123 = vmatpush.msra.mxu0 0.0
  %1124 = vmatpush.msra.mxu0 0.0
  %1125 = vmatpush.msra.mxu0 0.0
  %1126 = vmatpush.msra.mxu0 0.0
  %1127 = vmatpush.msra.mxu0 0.0
  %1128 = vmatpush.msra.mxu0 0.0
  %1129 = vmatpush.msra.mxu0 0.0
  %1130 = vmatpush.msra.mxu0 0.0
  %1131 = vmatpush.msra.mxu0 %v1114
  %1132 = vmatpush.msra.mxu0 %v1113
  %1133 = vmatmul.f32.gmra.mxu0 %v92
  %v1134 = vpop.f32.mrf.mxu0
  %v1135 = vadd.f32 0.0, %v1134
  %1136 = vmatmul.f32.gmra.mxu0 %v95
  %v1137 = vpop.f32.mrf.mxu0
  %v1138 = vadd.f32 0.0, %v1137
  %1139 = vmatmul.f32.gmra.mxu0 %v98
  %v1140 = vpop.f32.mrf.mxu0
  %v1141 = vadd.f32 0.0, %v1140
  %1142 = vmatmul.f32.gmra.mxu0 %v101
  %v1143 = vpop.f32.mrf.mxu0
  %v1144 = vadd.f32 0.0, %v1143
  %1145 = vdwg.mxu0
  %v1147 = vperm.slane %v1116, 0
  %v1149 = vmul.f32 %v1147, %v138
  %v1150 = vmul.f32 %v1147, %v143
  %v1151 = vmul.f32 %v1147, %v148
  %v1152 = vmul.f32 %v1147, %v153
  %v1153 = vadd.f32 %v1149, %v48
  %v1154 = vadd.f32 %v1150, %v53
  %v1155 = vadd.f32 %v1151, %v58
  %v1156 = vadd.f32 %v1152, %v63
  %v1157 = vmul.f32 %v1147, %v166
  %v1158 = vmul.f32 %v1147, %v171
  %v1159 = vadd.f32 %v1157, %v70
  %v1160 = vadd.f32 %v1158, %v75
  %v1161 = vadd.f32 %v1153, %v1135
  %v1162 = vadd.f32 %v1154, %v1138
  %v1163 = vadd.f32 %v1155, %v1141
  %v1164 = vadd.f32 %v1156, %v1144
  %v1165 = vxor.u32 %v1161, 2147483648
  %v1166 = vxor.u32 %v1162, 2147483648
  %v1167 = vxor.u32 %v1163, 2147483648
  %v1168 = vxor.u32 %v1164, 2147483648
  %v1169 = vmul.f32 %v1165, 1.442695
  %v1170 = vpow.pop %v1169
  %v1171 = vmul.f32 %v1166, 1.442695
  %v1172 = vpow.pop %v1171
  %v1173 = vmul.f32 %v1167, 1.442695
  %v1174 = vpow.pop %v1173
  %v1175 = vmul.f32 %v1168, 1.442695
  %v1176 = vpow.pop %v1175
  %v1177 = vadd.f32 %v1170, 1.0
  %v1178 = vadd.f32 %v1172, 1.0
  %v1179 = vadd.f32 %v1174, 1.0
  %v1180 = vadd.f32 %v1176, 1.0
  %v1181 = vrcp.pop %v1177
  %v1182 = vmul.f32 %v1177, %v1181
  %v1183 = vsub.f32 1.0, %v1182
  %v1184 = vmul.f32 %v1181, %v1183
  %v1185 = vadd.f32 %v1181, %v1184
  %vm1186 = vweird.f32 %v1177
  %vm1187 = vweird.f32 %v1181
  %vm1188 = vmor %vm1186, %vm1187
  %v1189 = vsel %vm1188, %v1181, %v1185
  %v1190 = vand.u32 2147483647, %v1177
  %vm1191 = vcmp.eq.f32.partialorder %v1190, 8.507059e+37
  %v1192 = vand.u32 %v1177, 2147483648
  %v1193 = vor.u32 1.1754944e-38, %v1192
  %v1194 = vsel %vm1191, %v1193, %v1189
  %v1195 = vmul.f32 1.0, %v1194
  %v1196 = vrcp.pop %v1178
  %v1197 = vmul.f32 %v1178, %v1196
  %v1198 = vsub.f32 1.0, %v1197
  %v1199 = vmul.f32 %v1196, %v1198
  %v1200 = vadd.f32 %v1196, %v1199
  %vm1201 = vweird.f32 %v1178
  %vm1202 = vweird.f32 %v1196
  %vm1203 = vmor %vm1201, %vm1202
  %v1204 = vsel %vm1203, %v1196, %v1200
  %v1205 = vand.u32 2147483647, %v1178
  %vm1206 = vcmp.eq.f32.partialorder %v1205, 8.507059e+37
  %v1207 = vand.u32 %v1178, 2147483648
  %v1208 = vor.u32 1.1754944e-38, %v1207
  %v1209 = vsel %vm1206, %v1208, %v1204
  %v1210 = vmul.f32 1.0, %v1209
  %v1211 = vrcp.pop %v1179
  %v1212 = vmul.f32 %v1179, %v1211
  %v1213 = vsub.f32 1.0, %v1212
  %v1214 = vmul.f32 %v1211, %v1213
  %v1215 = vadd.f32 %v1211, %v1214
  %vm1216 = vweird.f32 %v1179
  %vm1217 = vweird.f32 %v1211
  %vm1218 = vmor %vm1216, %vm1217
  %v1219 = vsel %vm1218, %v1211, %v1215
  %v1220 = vand.u32 2147483647, %v1179
  %vm1221 = vcmp.eq.f32.partialorder %v1220, 8.507059e+37
  %v1222 = vand.u32 %v1179, 2147483648
  %v1223 = vor.u32 1.1754944e-38, %v1222
  %v1224 = vsel %vm1221, %v1223, %v1219
  %v1225 = vmul.f32 1.0, %v1224
  %v1226 = vrcp.pop %v1180
  %v1227 = vmul.f32 %v1180, %v1226
  %v1228 = vsub.f32 1.0, %v1227
  %v1229 = vmul.f32 %v1226, %v1228
  %v1230 = vadd.f32 %v1226, %v1229
  %vm1231 = vweird.f32 %v1180
  %vm1232 = vweird.f32 %v1226
  %vm1233 = vmor %vm1231, %vm1232
  %v1234 = vsel %vm1233, %v1226, %v1230
  %v1235 = vand.u32 2147483647, %v1180
  %vm1236 = vcmp.eq.f32.partialorder %v1235, 8.507059e+37
  %v1237 = vand.u32 %v1180, 2147483648
  %v1238 = vor.u32 1.1754944e-38, %v1237
  %v1239 = vsel %vm1236, %v1238, %v1234
  %v1240 = vmul.f32 1.0, %v1239
  %1241 = vmatpush.msra.mxu0 0.0
  %1242 = vmatpush.msra.mxu0 0.0
  %1243 = vmatpush.msra.mxu0 0.0
  %1244 = vmatpush.msra.mxu0 0.0
  %1245 = vmatpush.msra.mxu0 0.0
  %1246 = vmatpush.msra.mxu0 0.0
  %1247 = vmatpush.msra.mxu0 0.0
  %1248 = vmatpush.msra.mxu0 0.0
  %1249 = vmatpush.msra.mxu0 0.0
  %1250 = vmatpush.msra.mxu0 0.0
  %1251 = vmatpush.msra.mxu0 0.0
  %1252 = vmatpush.msra.mxu0 0.0
  %1253 = vmatpush.msra.mxu0 0.0
  %1254 = vmatpush.msra.mxu0 0.0
  %1255 = vmatpush.msra.mxu0 %v1114
  %1256 = vmatpush.msra.mxu0 %v1113
  %1257 = vmatmul.f32.gmra.mxu0 %v258
  %v1258 = vpop.f32.mrf.mxu0
  %v1259 = vadd.f32 %v82, %v1258
  %1260 = vmatmul.f32.gmra.mxu0 %v261
  %v1261 = vpop.f32.mrf.mxu0
  %v1262 = vadd.f32 %v87, %v1261
  %1263 = vdwg.mxu0
  %v1264 = vmul.f32 %v1195, %v1259
  %v1265 = vmul.f32 %v1210, %v1262
  %v1266 = vadd.f32 %v1159, %v1264
  %v1267 = vadd.f32 %v1160, %v1265
  %v1268 = vtanh.pop %v1266
  %v1269 = vtanh.pop %v1267
  %v1270 = vsub.f32 1.0, %v1225
  %v1271 = vsub.f32 1.0, %v1240
  %v1272 = vmul.f32 %v1270, %v1268
  %v1273 = vmul.f32 %v1271, %v1269
  %v1274 = vmul.f32 %v1225, %v1113
  %v1275 = vmul.f32 %v1240, %v1114
  %v1276 = vadd.f32 %v1272, %v1274
  %v1277 = vadd.f32 %v1273, %v1275
  %s1278 = scalar_lea.vmem %s0, 7
  %v1279 = vld [vmem:[%s1278] sm:$0x1]
  %1280 = vmatpush.msra.mxu0 0.0
  %1281 = vmatpush.msra.mxu0 0.0
  %1282 = vmatpush.msra.mxu0 0.0
  %1283 = vmatpush.msra.mxu0 0.0
  %1284 = vmatpush.msra.mxu0 0.0
  %1285 = vmatpush.msra.mxu0 0.0
  %1286 = vmatpush.msra.mxu0 0.0
  %1287 = vmatpush.msra.mxu0 0.0
  %1288 = vmatpush.msra.mxu0 0.0
  %1289 = vmatpush.msra.mxu0 0.0
  %1290 = vmatpush.msra.mxu0 0.0
  %1291 = vmatpush.msra.mxu0 0.0
  %1292 = vmatpush.msra.mxu0 0.0
  %1293 = vmatpush.msra.mxu0 0.0
  %1294 = vmatpush.msra.mxu0 %v1277
  %1295 = vmatpush.msra.mxu0 %v1276
  %1296 = vmatmul.f32.gmra.mxu0 %v92
  %v1297 = vpop.f32.mrf.mxu0
  %v1298 = vadd.f32 0.0, %v1297
  %1299 = vmatmul.f32.gmra.mxu0 %v95
  %v1300 = vpop.f32.mrf.mxu0
  %v1301 = vadd.f32 0.0, %v1300
  %1302 = vmatmul.f32.gmra.mxu0 %v98
  %v1303 = vpop.f32.mrf.mxu0
  %v1304 = vadd.f32 0.0, %v1303
  %1305 = vmatmul.f32.gmra.mxu0 %v101
  %v1306 = vpop.f32.mrf.mxu0
  %v1307 = vadd.f32 0.0, %v1306
  %1308 = vdwg.mxu0
  %v1310 = vperm.slane %v1279, 0
  %v1312 = vmul.f32 %v1310, %v138
  %v1313 = vmul.f32 %v1310, %v143
  %v1314 = vmul.f32 %v1310, %v148
  %v1315 = vmul.f32 %v1310, %v153
  %v1316 = vadd.f32 %v1312, %v48
  %v1317 = vadd.f32 %v1313, %v53
  %v1318 = vadd.f32 %v1314, %v58
  %v1319 = vadd.f32 %v1315, %v63
  %v1320 = vmul.f32 %v1310, %v166
  %v1321 = vmul.f32 %v1310, %v171
  %v1322 = vadd.f32 %v1320, %v70
  %v1323 = vadd.f32 %v1321, %v75
  %v1324 = vadd.f32 %v1316, %v1298
  %v1325 = vadd.f32 %v1317, %v1301
  %v1326 = vadd.f32 %v1318, %v1304
  %v1327 = vadd.f32 %v1319, %v1307
  %v1328 = vxor.u32 %v1324, 2147483648
  %v1329 = vxor.u32 %v1325, 2147483648
  %v1330 = vxor.u32 %v1326, 2147483648
  %v1331 = vxor.u32 %v1327, 2147483648
  %v1332 = vmul.f32 %v1328, 1.442695
  %v1333 = vpow.pop %v1332
  %v1334 = vmul.f32 %v1329, 1.442695
  %v1335 = vpow.pop %v1334
  %v1336 = vmul.f32 %v1330, 1.442695
  %v1337 = vpow.pop %v1336
  %v1338 = vmul.f32 %v1331, 1.442695
  %v1339 = vpow.pop %v1338
  %v1340 = vadd.f32 %v1333, 1.0
  %v1341 = vadd.f32 %v1335, 1.0
  %v1342 = vadd.f32 %v1337, 1.0
  %v1343 = vadd.f32 %v1339, 1.0
  %v1344 = vrcp.pop %v1340
  %v1345 = vmul.f32 %v1340, %v1344
  %v1346 = vsub.f32 1.0, %v1345
  %v1347 = vmul.f32 %v1344, %v1346
  %v1348 = vadd.f32 %v1344, %v1347
  %vm1349 = vweird.f32 %v1340
  %vm1350 = vweird.f32 %v1344
  %vm1351 = vmor %vm1349, %vm1350
  %v1352 = vsel %vm1351, %v1344, %v1348
  %v1353 = vand.u32 2147483647, %v1340
  %vm1354 = vcmp.eq.f32.partialorder %v1353, 8.507059e+37
  %v1355 = vand.u32 %v1340, 2147483648
  %v1356 = vor.u32 1.1754944e-38, %v1355
  %v1357 = vsel %vm1354, %v1356, %v1352
  %v1358 = vmul.f32 1.0, %v1357
  %v1359 = vrcp.pop %v1341
  %v1360 = vmul.f32 %v1341, %v1359
  %v1361 = vsub.f32 1.0, %v1360
  %v1362 = vmul.f32 %v1359, %v1361
  %v1363 = vadd.f32 %v1359, %v1362
  %vm1364 = vweird.f32 %v1341
  %vm1365 = vweird.f32 %v1359
  %vm1366 = vmor %vm1364, %vm1365
  %v1367 = vsel %vm1366, %v1359, %v1363
  %v1368 = vand.u32 2147483647, %v1341
  %vm1369 = vcmp.eq.f32.partialorder %v1368, 8.507059e+37
  %v1370 = vand.u32 %v1341, 2147483648
  %v1371 = vor.u32 1.1754944e-38, %v1370
  %v1372 = vsel %vm1369, %v1371, %v1367
  %v1373 = vmul.f32 1.0, %v1372
  %v1374 = vrcp.pop %v1342
  %v1375 = vmul.f32 %v1342, %v1374
  %v1376 = vsub.f32 1.0, %v1375
  %v1377 = vmul.f32 %v1374, %v1376
  %v1378 = vadd.f32 %v1374, %v1377
  %vm1379 = vweird.f32 %v1342
  %vm1380 = vweird.f32 %v1374
  %vm1381 = vmor %vm1379, %vm1380
  %v1382 = vsel %vm1381, %v1374, %v1378
  %v1383 = vand.u32 2147483647, %v1342
  %vm1384 = vcmp.eq.f32.partialorder %v1383, 8.507059e+37
  %v1385 = vand.u32 %v1342, 2147483648
  %v1386 = vor.u32 1.1754944e-38, %v1385
  %v1387 = vsel %vm1384, %v1386, %v1382
  %v1388 = vmul.f32 1.0, %v1387
  %v1389 = vrcp.pop %v1343
  %v1390 = vmul.f32 %v1343, %v1389
  %v1391 = vsub.f32 1.0, %v1390
  %v1392 = vmul.f32 %v1389, %v1391
  %v1393 = vadd.f32 %v1389, %v1392
  %vm1394 = vweird.f32 %v1343
  %vm1395 = vweird.f32 %v1389
  %vm1396 = vmor %vm1394, %vm1395
  %v1397 = vsel %vm1396, %v1389, %v1393
  %v1398 = vand.u32 2147483647, %v1343
  %vm1399 = vcmp.eq.f32.partialorder %v1398, 8.507059e+37
  %v1400 = vand.u32 %v1343, 2147483648
  %v1401 = vor.u32 1.1754944e-38, %v1400
  %v1402 = vsel %vm1399, %v1401, %v1397
  %v1403 = vmul.f32 1.0, %v1402
  %1404 = vmatpush.msra.mxu0 0.0
  %1405 = vmatpush.msra.mxu0 0.0
  %1406 = vmatpush.msra.mxu0 0.0
  %1407 = vmatpush.msra.mxu0 0.0
  %1408 = vmatpush.msra.mxu0 0.0
  %1409 = vmatpush.msra.mxu0 0.0
  %1410 = vmatpush.msra.mxu0 0.0
  %1411 = vmatpush.msra.mxu0 0.0
  %1412 = vmatpush.msra.mxu0 0.0
  %1413 = vmatpush.msra.mxu0 0.0
  %1414 = vmatpush.msra.mxu0 0.0
  %1415 = vmatpush.msra.mxu0 0.0
  %1416 = vmatpush.msra.mxu0 0.0
  %1417 = vmatpush.msra.mxu0 0.0
  %1418 = vmatpush.msra.mxu0 %v1277
  %1419 = vmatpush.msra.mxu0 %v1276
  %1420 = vmatmul.f32.gmra.mxu0 %v258
  %v1421 = vpop.f32.mrf.mxu0
  %v1422 = vadd.f32 %v82, %v1421
  %1423 = vmatmul.f32.gmra.mxu0 %v261
  %v1424 = vpop.f32.mrf.mxu0
  %v1425 = vadd.f32 %v87, %v1424
  %1426 = vdwg.mxu0
  %v1427 = vmul.f32 %v1358, %v1422
  %v1428 = vmul.f32 %v1373, %v1425
  %v1429 = vadd.f32 %v1322, %v1427
  %v1430 = vadd.f32 %v1323, %v1428
  %v1431 = vtanh.pop %v1429
  %v1432 = vtanh.pop %v1430
  %v1433 = vsub.f32 1.0, %v1388
  %v1434 = vsub.f32 1.0, %v1403
  %v1435 = vmul.f32 %v1433, %v1431
  %v1436 = vmul.f32 %v1434, %v1432
  %v1437 = vmul.f32 %v1388, %v1276
  %v1438 = vmul.f32 %v1403, %v1277
  %v1439 = vadd.f32 %v1435, %v1437
  %v1440 = vadd.f32 %v1436, %v1438
  %v1441 = vmax.f32 %v1439, 0.0
  %v1442 = vmax.f32 %v1440, 0.0
  %v1443 = vld [vmem:[%s6] sm:$0x1f]
  %v1444 = vld [vmem:[%s7] sm:$0x1f]
  %1446 = vset.pattern.permute.xlu0 0
  %1447 = vperm.xlu0 %1446, %v1444
  %v1448 = vpop.permute.xlu0 %1447
  %v1451 = vsel %vm90, %v1443, 0
  %1453 = vmatpush.msra.mxu0 0.0
  %1454 = vmatpush.msra.mxu0 0.0
  %1455 = vmatpush.msra.mxu0 0.0
  %1456 = vmatpush.msra.mxu0 0.0
  %1457 = vmatpush.msra.mxu0 0.0
  %1458 = vmatpush.msra.mxu0 0.0
  %1459 = vmatpush.msra.mxu0 0.0
  %1460 = vmatpush.msra.mxu0 0.0
  %1461 = vmatpush.msra.mxu0 0.0
  %1462 = vmatpush.msra.mxu0 0.0
  %1463 = vmatpush.msra.mxu0 0.0
  %1464 = vmatpush.msra.mxu0 0.0
  %1465 = vmatpush.msra.mxu0 0.0
  %1466 = vmatpush.msra.mxu0 0.0
  %1467 = vmatpush.msra.mxu0 %v1442
  %1468 = vmatpush.msra.mxu0 %v1441
  %1469 = vmatmul.f32.gmra.mxu0 %v1451
  %v1470 = vpop.f32.mrf.mxu0
  %v1471 = vadd.f32 %v1448, %v1470
  %1472 = vdwg.mxu0
  %vm1473 = vcmask 12288
  %1474 = vst.msk [vmem:[%s8] sm:$0x1f] %vm1473, %v1471
  // Predicated region
  $region34: #{tpu_custom_call.1} parent=0 // pred_check
    _
  $region35: #{tpu_custom_call.1} parent=0 // pred_check_branch
    %1476 = sbr.rel (0) target = $region37
  $region36: #{tpu_custom_call.1} parent=0 // pred_region
    _
  $region37: #{tpu_custom_call.1} parent=0 // pred_fallthru
    _
  // Predicated region
  $region38: #{tpu_custom_call.1} parent=0 // pred_check
    _
  $region39: #{tpu_custom_call.1} parent=0 // pred_check_branch
    %1478 = sbr.rel (0) target = $region41
  $region40: #{tpu_custom_call.1} parent=0 // pred_region
    _
  $region41: #{tpu_custom_call.1} parent=0 // pred_fallthru
    _

</llo_original>
